<compile_context>
chip_gen: v5e
topology: v5e:2x2
jax: 0.10.0
libtpu: 0.0.40
codegen_flags: <defaults>
</compile_context>

<pallas_src>
import jax
import jax.numpy as jnp
from jax import lax
from jax.experimental import pallas as pl
from jax.experimental.pallas import tpu as pltpu


def _round_up(x, m):
    return (x + m - 1) // m * m


def _pick_time_chunk(T, Bp, Hp, vmem_budget=8 * 1024 * 1024):
    """Largest Tc (multiple of 8) dividing T whose chunk scratch fits the budget."""
    for tc in (128, 64, 32, 16, 8):
        if T % tc == 0:
            scratch_bytes = Bp * tc * (4 * Hp + Hp) * 4   # xg (f32) + hall (f32)
            if scratch_bytes <= vmem_budget:
                return tc
    return T   # non-multiple-of-8 T: chunk covers the full time axis (full-dim rule)


# ----------------------------------------------------------------------------
# Kernel: one grid step == one chunk of Tc timesteps.
# ----------------------------------------------------------------------------
def _lstm_chunk_kernel(emb_ref,      # (Bp, Tc, E)   embedded inputs, batch-first, f32
                       wih_ref,      # (E, 4Hp)      input -> gates, bf16 (padded)
                       whh_ref,      # (Hp, 4Hp)     hidden -> gates, bf16
                       b_ref,        # (1, 4Hp)      b_ih + b_hh, f32
                       wout_ref,     # (Hp, Vp)      output projection, bf16
                       bout_ref,     # (1, Vp)       f32
                       h0_ref,       # (Bp, Hp)      initial hidden, f32
                       c0_ref,       # (Bp, Hp)      initial cell, f32
                       logits_ref,   # (Bp, Tc, Vp)  out: logits for this chunk
                       hn_ref,       # (Bp, Hp)      out: final hidden
                       cn_ref,       # (Bp, Hp)      out: final cell
                       h_scr,        # VMEM (Bp, Hp) f32      carry across chunks
                       c_scr,        # VMEM (Bp, Hp) f32      carry across chunks
                       xg_scr,       # VMEM (Tc*Bp, 4Hp) f32  gate inputs, TIME-major
                       hall_scr):    # VMEM (Tc*Bp, Hp)  f32  hidden states, TIME-major
    chunk = pl.program_id(0)
    Bp, Tc, E = emb_ref.shape
    Hp = h_scr.shape[-1]
    Vp = logits_ref.shape[-1]

    @pl.when(chunk == 0)
    def _():
        h_scr[...] = h0_ref[...]
        c_scr[...] = c0_ref[...]

    # ---- (1) hoisted input projection: ONE dense matmul for the whole chunk ----
    # Transpose the emb tile to time-major once (XLU, off the serial critical path)
    # so the per-step read below is a contiguous, aligned slice.
    x_tm = pltpu.einshape("bte->tbe", emb_ref[...]).reshape(Tc * Bp, E)
    xg_scr[...] = (jnp.dot(x_tm.astype(jnp.bfloat16), wih_ref[...],
                           preferred_element_type=jnp.float32)
                   + b_ref[...])                       # rows: t*Bp + b

    whh = whh_ref[...]                                 # (Hp, 4Hp) bf16, stays resident

    # ---- (2) serial recurrence over the chunk (statically unrolled) ----
    h = h_scr[...]
    c = c_scr[...]
    for t in range(Tc):
        # gate inputs for step t, all batch rows: contiguous, 8-row aligned slice.
        g_x = xg_scr[pl.ds(t * Bp, Bp), :]             # (Bp, 4Hp) f32
        gates = g_x + jnp.dot(h.astype(jnp.bfloat16), whh,
                              preferred_element_type=jnp.float32)
        # Packed gate order [i, f, o, g]: one sigmoid over 3*Hp lanes, one tanh.
        sig = jax.nn.sigmoid(gates[:, : 3 * Hp])
        i_g = sig[:, 0 * Hp:1 * Hp]
        f_g = sig[:, 1 * Hp:2 * Hp]
        o_g = sig[:, 2 * Hp:3 * Hp]
        g_g = jnp.tanh(gates[:, 3 * Hp:4 * Hp])
        c = f_g * c + i_g * g_g
        h = o_g * jnp.tanh(c)
        hall_scr[pl.ds(t * Bp, Bp), :] = h             # time-major rows: t*Bp + b
    h_scr[...] = h
    c_scr[...] = c

    # ---- (3) hoisted output projection: ONE dense matmul for the whole chunk ----
    lg = (jnp.dot(hall_scr[...].astype(jnp.bfloat16), wout_ref[...],
                  preferred_element_type=jnp.float32)
          + bout_ref[...])                             # (Tc*Bp, Vp), rows t*Bp + b
    # One XLU transpose + one lane-dense unmasked full-block store (no scatter loop).
    logits_ref[...] = pltpu.einshape("tbv->btv",
                                     lg.reshape(Tc, Bp, Vp)).astype(logits_ref.dtype)

    @pl.when(chunk == pl.num_programs(0) - 1)
    def _():
        hn_ref[...] = h
        cn_ref[...] = c


def _lstm_pallas(emb_p, wih_t, whh_t, b_gates, wout_t, b_out, h0_p, c0_p):
    Bp, T, E = emb_p.shape
    Hp = h0_p.shape[-1]
    Vp = wout_t.shape[-1]
    Tc = _pick_time_chunk(T, Bp, Hp)
    n_chunks = T // Tc

    grid_spec = pltpu.PrefetchScalarGridSpec(
        num_scalar_prefetch=0,
        grid=(n_chunks,),
        in_specs=[
            pl.BlockSpec((Bp, Tc, E), lambda t: (0, t, 0)),    # emb, one time-chunk
            pl.BlockSpec((E, 4 * Hp), lambda t: (0, 0)),       # W_ih^T (bf16, resident)
            pl.BlockSpec((Hp, 4 * Hp), lambda t: (0, 0)),      # W_hh^T (bf16, resident)
            pl.BlockSpec((1, 4 * Hp), lambda t: (0, 0)),       # fused gate bias
            pl.BlockSpec((Hp, Vp), lambda t: (0, 0)),          # W_out^T (bf16, resident)
            pl.BlockSpec((1, Vp), lambda t: (0, 0)),           # b_out
            pl.BlockSpec((Bp, Hp), lambda t: (0, 0)),          # h0
            pl.BlockSpec((Bp, Hp), lambda t: (0, 0)),          # c0
        ],
        out_specs=[
            pl.BlockSpec((Bp, Tc, Vp), lambda t: (0, t, 0)),   # logits (batch-first)
            pl.BlockSpec((Bp, Hp), lambda t: (0, 0)),          # h_n
            pl.BlockSpec((Bp, Hp), lambda t: (0, 0)),          # c_n
        ],
        scratch_shapes=[
            pltpu.VMEM((Bp, Hp), jnp.float32),                 # h carry
            pltpu.VMEM((Bp, Hp), jnp.float32),                 # c carry
            pltpu.VMEM((Tc * Bp, 4 * Hp), jnp.float32),        # gate inputs, time-major
            pltpu.VMEM((Tc * Bp, Hp), jnp.float32),            # chunk hidden, time-major
        ],
    )

    out_shapes = (
        jax.ShapeDtypeStruct((Bp, T, Vp), jnp.float32),
        jax.ShapeDtypeStruct((Bp, Hp), jnp.float32),
        jax.ShapeDtypeStruct((Bp, Hp), jnp.float32),
    )

    return pl.pallas_call(
        _lstm_chunk_kernel,
        out_shape=out_shapes,
        grid_spec=grid_spec,
        input_output_aliases={6: 1, 7: 2},                     # h0->h_n, c0->c_n
        compiler_params=pltpu.CompilerParams(
            dimension_semantics=("arbitrary",),                # recurrence => sequential
            vmem_limit_bytes=64 * 1024 * 1024),
    )(emb_p, wih_t, whh_t, b_gates, wout_t, b_out, h0_p, c0_p)


# ----------------------------------------------------------------------------
# Wrapper matching Generator.forward(x, hidden=None)
# ----------------------------------------------------------------------------
@jax.jit
def generator_forward(params, x_tokens, h0, c0):
    B, T = x_tokens.shape
    V, E = params["embedding"].shape
    H = h0.shape[-1]
    Hp = params["whh_t"].shape[0]
    Vp = params["wout_t"].shape[-1]
    Bp = _round_up(max(B, 8), 8)

    # TODO(synk): embedding gather stays as a plain-JAX lookup (a DMA-gather
    # Pallas kernel is possible but not worthwhile for this module).
    emb = params["embedding"][x_tokens]                          # (B, T, E)

    # Pad batch to a full sublane tile and hidden to full lane tiles (zeros);
    # padded rows/lanes stay zero through the recurrence and are sliced off below.
    emb_p = jnp.zeros((Bp, T, E), emb.dtype).at[:B].set(emb)
    h0_p = jnp.zeros((Bp, Hp), jnp.float32).at[:B, :H].set(h0)
    c0_p = jnp.zeros((Bp, Hp), jnp.float32).at[:B, :H].set(c0)

    logits_p, hn_p, cn_p = _lstm_pallas(
        emb_p,
        params["wih_t"], params["whh_t"], params["b_gates"],
        params["wout_t"], params["b_out"],
        h0_p, c0_p,
    )

    logits = logits_p[:B, :, :V]                                 # (B, T, V)
    h_n = hn_p[:B, :H][None, :, :]                               # (1, B, H) like nn.LSTM
    c_n = cn_p[:B, :H][None, :, :]
    return logits, (h_n, c_n)


# ----------------------------------------------------------------------------
# Parameters: raw PyTorch-layout weights + padded/lane-aligned kernel layout.
# ----------------------------------------------------------------------------
def init_raw_params(key, vocab_size, embedding_dim, hidden_dim):
    ks = jax.random.split(key, 7)
    V, E, H = vocab_size, embedding_dim, hidden_dim
    s = 0.1
    return {
        "embedding": s * jax.random.normal(ks[0], (V, E), jnp.float32),
        "w_ih": s * jax.random.normal(ks[1], (4 * H, E), jnp.float32),   # (4H, E)
        "w_hh": s * jax.random.normal(ks[2], (4 * H, H), jnp.float32),   # (4H, H)
        "b_ih": s * jax.random.normal(ks[3], (4 * H,), jnp.float32),
        "b_hh": s * jax.random.normal(ks[4], (4 * H,), jnp.float32),
        "w_out": s * jax.random.normal(ks[5], (V, H), jnp.float32),      # (V, H)
        "b_out": s * jax.random.normal(ks[6], (V,), jnp.float32),
    }


def pack_params(raw, *, lane=128):
    """Transpose + zero-pad weights so every gate / the vocab is lane-aligned.

    Weights are stored bf16 (MXU-native on all generations); biases stay f32.
    Packed gate order is [i, f, o, g] (PyTorch stores [i, f, g, o]) so the kernel
    issues sigmoid once over the first 3*Hp lanes and tanh once over the last Hp.
    """
    V, E = raw["embedding"].shape
    H = raw["w_hh"].shape[1]
    Hp = _round_up(H, lane)
    Vp = _round_up(V, lane)

    src = (0, 1, 3, 2)                                  # packed slot k <- PyTorch gate src[k]
    wih_t = jnp.zeros((E, 4 * Hp), jnp.float32)
    whh_t = jnp.zeros((Hp, 4 * Hp), jnp.float32)
    b = jnp.zeros((1, 4 * Hp), jnp.float32)
    for k, s in enumerate(src):
        wih_t = wih_t.at[:, k * Hp:k * Hp + H].set(raw["w_ih"][s * H:(s + 1) * H, :].T)
        whh_t = whh_t.at[:H, k * Hp:k * Hp + H].set(raw["w_hh"][s * H:(s + 1) * H, :].T)
        b = b.at[0, k * Hp:k * Hp + H].set(
            raw["b_ih"][s * H:(s + 1) * H] + raw["b_hh"][s * H:(s + 1) * H])

    wout_t = jnp.zeros((Hp, Vp), jnp.float32).at[:H, :V].set(raw["w_out"].T)
    b_out = jnp.zeros((1, Vp), jnp.float32).at[0, :V].set(raw["b_out"])

    return {"embedding": raw["embedding"],
            "wih_t": wih_t.astype(jnp.bfloat16),
            "whh_t": whh_t.astype(jnp.bfloat16),
            "b_gates": b,
            "wout_t": wout_t.astype(jnp.bfloat16),
            "b_out": b_out}


# ----------------------------------------------------------------------------
# Pure-JAX reference (lax.scan LSTM, f32) for correctness checking.
# ----------------------------------------------------------------------------
def reference_forward(raw, x_tokens, h0, c0):
    emb = raw["embedding"][x_tokens]                    # (B, T, E)
    H = h0.shape[-1]
    wih_t = raw["w_ih"].T
    whh_t = raw["w_hh"].T
    b = raw["b_ih"] + raw["b_hh"]
    wout_t = raw["w_out"].T

    def step(carry, x_t):
        h, c = carry
        gates = x_t @ wih_t + h @ whh_t + b
        i = jax.nn.sigmoid(gates[:, 0 * H:1 * H])
        f = jax.nn.sigmoid(gates[:, 1 * H:2 * H])
        g = jnp.tanh(gates[:, 2 * H:3 * H])
        o = jax.nn.sigmoid(gates[:, 3 * H:4 * H])
        c_new = f * c + i * g
        h_new = o * jnp.tanh(c_new)
        return (h_new, c_new), h_new @ wout_t + raw["b_out"]

    (h_n, c_n), logits_tm = lax.scan(step, (h0, c0), jnp.transpose(emb, (1, 0, 2)))
    return jnp.transpose(logits_tm, (1, 0, 2)), (h_n[None], c_n[None])


if __name__ == "__main__":
    # Small shapes consistent with the module.
    vocab_size = 16
    embedding_dim = 32
    hidden_dim = 32
    sequence_length = 8
    batch = 2

    key = jax.random.PRNGKey(0)
    k_param, k_tok = jax.random.split(key)

    raw = init_raw_params(k_param, vocab_size, embedding_dim, hidden_dim)
    params = pack_params(raw)
    x_tokens = jax.random.randint(k_tok, (batch, sequence_length), 0, vocab_size,
                                  dtype=jnp.int32)

    # hidden=None in the PyTorch module -> zero initial state.
    h0 = jnp.zeros((batch, hidden_dim), jnp.float32)
    c0 = jnp.zeros((batch, hidden_dim), jnp.float32)

    logits, (h_n, c_n) = generator_forward(params, x_tokens, h0, c0)
    jax.block_until_ready(logits)
    jax.block_until_ready(h_n)
    jax.block_until_ready(c_n)

    # Cross-check against the pure-JAX f32 reference (kernel uses bf16 matmul
    # operands with f32 accumulation, so tolerances are bf16-scale).
    ref_logits, (ref_h, ref_c) = reference_forward(raw, x_tokens, h0, c0)
    assert logits.shape == (batch, sequence_length, vocab_size)
    assert h_n.shape == (1, batch, hidden_dim) and c_n.shape == (1, batch, hidden_dim)
    assert jnp.allclose(logits, ref_logits, atol=2e-2, rtol=2e-2)
    assert jnp.allclose(h_n, ref_h, atol=2e-2, rtol=2e-2)
    assert jnp.allclose(c_n, ref_c, atol=2e-2, rtol=2e-2)

    print("KERNEL_OK")
</pallas_src>

<mosaic_0001>
module attributes {stable_mosaic.version = 11 : i64} {
  func.func @_lstm_chunk_kernel(%arg0: i32, %arg1: memref<8x8x32xf32, #tpu.memory_space<vmem>>, %arg2: memref<32x512xbf16, #tpu.memory_space<vmem>>, %arg3: memref<128x512xbf16, #tpu.memory_space<vmem>>, %arg4: memref<1x512xf32, #tpu.memory_space<vmem>>, %arg5: memref<128x128xbf16, #tpu.memory_space<vmem>>, %arg6: memref<1x128xf32, #tpu.memory_space<vmem>>, %arg7: memref<8x128xf32, #tpu.memory_space<vmem>>, %arg8: memref<8x128xf32, #tpu.memory_space<vmem>>, %arg9: memref<8x8x128xf32, #tpu.memory_space<vmem>>, %arg10: memref<8x128xf32, #tpu.memory_space<vmem>>, %arg11: memref<8x128xf32, #tpu.memory_space<vmem>>, %arg12: memref<8x128xf32, #tpu.memory_space<vmem>>, %arg13: memref<8x128xf32, #tpu.memory_space<vmem>>, %arg14: memref<64x512xf32, #tpu.memory_space<vmem>>, %arg15: memref<64x128xf32, #tpu.memory_space<vmem>>) attributes {dimension_semantics = [#tpu.dimension_semantics<arbitrary>], iteration_bounds = array<i64: 1>, scalar_prefetch = 0 : i64, scratch_operands = 4 : i64, tpu.core_type = #tpu.core_type<tc>, window_params = [{transform_indices = @transform_0, window_bounds = array<i64: 8, 8, 32>}, {pipeline_mode = #tpu.pipeline_mode<synchronous>, transform_indices = @transform_1, window_bounds = array<i64: 32, 512>}, {pipeline_mode = #tpu.pipeline_mode<synchronous>, transform_indices = @transform_2, window_bounds = array<i64: 128, 512>}, {pipeline_mode = #tpu.pipeline_mode<synchronous>, transform_indices = @transform_3, window_bounds = array<i64: 1, 512>}, {pipeline_mode = #tpu.pipeline_mode<synchronous>, transform_indices = @transform_4, window_bounds = array<i64: 128, 128>}, {pipeline_mode = #tpu.pipeline_mode<synchronous>, transform_indices = @transform_5, window_bounds = array<i64: 1, 128>}, {pipeline_mode = #tpu.pipeline_mode<synchronous>, transform_indices = @transform_6, window_bounds = array<i64: 8, 128>}, {pipeline_mode = #tpu.pipeline_mode<synchronous>, transform_indices = @transform_7, window_bounds = array<i64: 8, 128>}, {transform_indices = @transform_8, window_bounds = array<i64: 8, 8, 128>}, {pipeline_mode = #tpu.pipeline_mode<synchronous>, transform_indices = @transform_9, window_bounds = array<i64: 8, 128>}, {pipeline_mode = #tpu.pipeline_mode<synchronous>, transform_indices = @transform_10, window_bounds = array<i64: 8, 128>}]} {
    %c0_i32 = arith.constant 0 : i32
    %0 = arith.cmpi eq, %arg0, %c0_i32 : i32
    %1 = arith.extui %0 : i1 to i32
    %c0_i32_0 = arith.constant 0 : i32
    %2 = arith.cmpi ne, %1, %c0_i32_0 : i32
    scf.if %2 {
      %c0_72 = arith.constant 0 : index
      %c0_73 = arith.constant 0 : index
      %199 = vector.load %arg7[%c0_72, %c0_73] : memref<8x128xf32, #tpu.memory_space<vmem>>, vector<8x128xf32>
      %c0_74 = arith.constant 0 : index
      %c0_75 = arith.constant 0 : index
      %200 = vector.load %arg12[%c0_74, %c0_75] : memref<8x128xf32, #tpu.memory_space<vmem>>, vector<8x128xf32>
      tpu.vector_store %arg12[%c0_74, %c0_75], %199 {strides = array<i32>} : memref<8x128xf32, #tpu.memory_space<vmem>>, vector<8x128xf32>,
      %c0_76 = arith.constant 0 : index
      %c0_77 = arith.constant 0 : index
      %201 = vector.load %arg8[%c0_76, %c0_77] : memref<8x128xf32, #tpu.memory_space<vmem>>, vector<8x128xf32>
      %c0_78 = arith.constant 0 : index
      %c0_79 = arith.constant 0 : index
      %202 = vector.load %arg13[%c0_78, %c0_79] : memref<8x128xf32, #tpu.memory_space<vmem>>, vector<8x128xf32>
      tpu.vector_store %arg13[%c0_78, %c0_79], %201 {strides = array<i32>} : memref<8x128xf32, #tpu.memory_space<vmem>>, vector<8x128xf32>,
    } else {
    }
    %c0 = arith.constant 0 : index
    %c0_1 = arith.constant 0 : index
    %c0_2 = arith.constant 0 : index
    %3 = vector.load %arg1[%c0, %c0_1, %c0_2] : memref<8x8x32xf32, #tpu.memory_space<vmem>>, vector<8x8x32xf32>
    %4 = tpu.transpose %3, [1, 0, 2] : vector<8x8x32xf32> -> vector<8x8x32xf32>
    %5 = vector.shape_cast %4 : vector<8x8x32xf32> to vector<64x32xf32>
    %6 = arith.truncf %5 : vector<64x32xf32> to vector<64x32xbf16>
    %c0_3 = arith.constant 0 : index
    %c0_4 = arith.constant 0 : index
    %7 = vector.load %arg2[%c0_3, %c0_4] : memref<32x512xbf16, #tpu.memory_space<vmem>>, vector<32x512xbf16>
    %cst = arith.constant dense<0.000000e+00> : vector<64x512xf32>
    %8 = tpu.matmul %6, %7, %cst {dimension_numbers = #tpu.dot_dimension_numbers<[1], [0], [0], [1], [0, 0, 1, 1], [], []>} : vector<64x32xbf16>, vector<32x512xbf16>, vector<64x512xf32> -> vector<64x512xf32>
    %c0_5 = arith.constant 0 : index
    %c0_6 = arith.constant 0 : index
    %9 = vector.load %arg4[%c0_5, %c0_6] : memref<1x512xf32, #tpu.memory_space<vmem>>, vector<1x512xf32>
    %10 = vector.broadcast %9 : vector<1x512xf32> to vector<64x512xf32>
    %11 = arith.addf %8, %10 : vector<64x512xf32>
    %c0_7 = arith.constant 0 : index
    %c0_8 = arith.constant 0 : index
    %12 = vector.load %arg14[%c0_7, %c0_8] : memref<64x512xf32, #tpu.memory_space<vmem>>, vector<64x512xf32>
    tpu.vector_store %arg14[%c0_7, %c0_8], %11 {strides = array<i32>} : memref<64x512xf32, #tpu.memory_space<vmem>>, vector<64x512xf32>,
    %c0_9 = arith.constant 0 : index
    %c0_10 = arith.constant 0 : index
    %13 = vector.load %arg3[%c0_9, %c0_10] : memref<128x512xbf16, #tpu.memory_space<vmem>>, vector<128x512xbf16>
    %c0_11 = arith.constant 0 : index
    %c0_12 = arith.constant 0 : index
    %14 = vector.load %arg12[%c0_11, %c0_12] : memref<8x128xf32, #tpu.memory_space<vmem>>, vector<8x128xf32>
    %c0_13 = arith.constant 0 : index
    %c0_14 = arith.constant 0 : index
    %15 = vector.load %arg13[%c0_13, %c0_14] : memref<8x128xf32, #tpu.memory_space<vmem>>, vector<8x128xf32>
    %c0_15 = arith.constant 0 : index
    %c0_16 = arith.constant 0 : index
    %16 = vector.load %arg14[%c0_15, %c0_16] : memref<64x512xf32, #tpu.memory_space<vmem>>, vector<8x512xf32>
    %17 = arith.truncf %14 : vector<8x128xf32> to vector<8x128xbf16>
    %cst_17 = arith.constant dense<0.000000e+00> : vector<8x512xf32>
    %18 = tpu.matmul %17, %13, %cst_17 {dimension_numbers = #tpu.dot_dimension_numbers<[1], [0], [0], [1], [0, 0, 1, 1], [], []>} : vector<8x128xbf16>, vector<128x512xbf16>, vector<8x512xf32> -> vector<8x512xf32>
    %19 = arith.addf %16, %18 : vector<8x512xf32>
    %20 = vector.extract_strided_slice %19 {offsets = [0, 0], sizes = [8, 384], strides = [1, 1]} : vector<8x512xf32> to vector<8x384xf32>
    %21 = arith.negf %20 : vector<8x384xf32>
    %22 = math.exp %21 : vector<8x384xf32>
    %cst_18 = arith.constant 1.000000e+00 : f32
    %23 = vector.broadcast %cst_18 : f32 to vector<8x384xf32>
    %24 = arith.addf %23, %22 : vector<8x384xf32>
    %25 = arith.divf %23, %24 : vector<8x384xf32>
    %26 = vector.extract_strided_slice %25 {offsets = [0, 0], sizes = [8, 128], strides = [1, 1]} : vector<8x384xf32> to vector<8x128xf32>
    %27 = vector.extract_strided_slice %25 {offsets = [0, 128], sizes = [8, 128], strides = [1, 1]} : vector<8x384xf32> to vector<8x128xf32>
    %28 = vector.extract_strided_slice %25 {offsets = [0, 256], sizes = [8, 128], strides = [1, 1]} : vector<8x384xf32> to vector<8x128xf32>
    %29 = vector.extract_strided_slice %19 {offsets = [0, 384], sizes = [8, 128], strides = [1, 1]} : vector<8x512xf32> to vector<8x128xf32>
    %30 = math.tanh %29 : vector<8x128xf32>
    %31 = arith.mulf %27, %15 : vector<8x128xf32>
    %32 = arith.mulf %26, %30 : vector<8x128xf32>
    %33 = arith.addf %31, %32 : vector<8x128xf32>
    %34 = math.tanh %33 : vector<8x128xf32>
    %35 = arith.mulf %28, %34 : vector<8x128xf32>
    %c0_19 = arith.constant 0 : index
    %c0_20 = arith.constant 0 : index
    %36 = vector.load %arg15[%c0_19, %c0_20] : memref<64x128xf32, #tpu.memory_space<vmem>>, vector<8x128xf32>
    tpu.vector_store %arg15[%c0_19, %c0_20], %35 {strides = array<i32>} : memref<64x128xf32, #tpu.memory_space<vmem>>, vector<8x128xf32>,
    %c8 = arith.constant 8 : index
    %c0_21 = arith.constant 0 : index
    %37 = vector.load %arg14[%c8, %c0_21] : memref<64x512xf32, #tpu.memory_space<vmem>>, vector<8x512xf32>
    %38 = arith.truncf %35 : vector<8x128xf32> to vector<8x128xbf16>
    %cst_22 = arith.constant dense<0.000000e+00> : vector<8x512xf32>
    %39 = tpu.matmul %38, %13, %cst_22 {dimension_numbers = #tpu.dot_dimension_numbers<[1], [0], [0], [1], [0, 0, 1, 1], [], []>} : vector<8x128xbf16>, vector<128x512xbf16>, vector<8x512xf32> -> vector<8x512xf32>
    %40 = arith.addf %37, %39 : vector<8x512xf32>
    %41 = vector.extract_strided_slice %40 {offsets = [0, 0], sizes = [8, 384], strides = [1, 1]} : vector<8x512xf32> to vector<8x384xf32>
    %42 = arith.negf %41 : vector<8x384xf32>
    %43 = math.exp %42 : vector<8x384xf32>
    %cst_23 = arith.constant 1.000000e+00 : f32
    %44 = vector.broadcast %cst_23 : f32 to vector<8x384xf32>
    %45 = arith.addf %44, %43 : vector<8x384xf32>
    %46 = arith.divf %44, %45 : vector<8x384xf32>
    %47 = vector.extract_strided_slice %46 {offsets = [0, 0], sizes = [8, 128], strides = [1, 1]} : vector<8x384xf32> to vector<8x128xf32>
    %48 = vector.extract_strided_slice %46 {offsets = [0, 128], sizes = [8, 128], strides = [1, 1]} : vector<8x384xf32> to vector<8x128xf32>
    %49 = vector.extract_strided_slice %46 {offsets = [0, 256], sizes = [8, 128], strides = [1, 1]} : vector<8x384xf32> to vector<8x128xf32>
    %50 = vector.extract_strided_slice %40 {offsets = [0, 384], sizes = [8, 128], strides = [1, 1]} : vector<8x512xf32> to vector<8x128xf32>
    %51 = math.tanh %50 : vector<8x128xf32>
    %52 = arith.mulf %48, %33 : vector<8x128xf32>
    %53 = arith.mulf %47, %51 : vector<8x128xf32>
    %54 = arith.addf %52, %53 : vector<8x128xf32>
    %55 = math.tanh %54 : vector<8x128xf32>
    %56 = arith.mulf %49, %55 : vector<8x128xf32>
    %c8_24 = arith.constant 8 : index
    %c0_25 = arith.constant 0 : index
    %57 = vector.load %arg15[%c8_24, %c0_25] : memref<64x128xf32, #tpu.memory_space<vmem>>, vector<8x128xf32>
    tpu.vector_store %arg15[%c8_24, %c0_25], %56 {strides = array<i32>} : memref<64x128xf32, #tpu.memory_space<vmem>>, vector<8x128xf32>,
    %c16 = arith.constant 16 : index
    %c0_26 = arith.constant 0 : index
    %58 = vector.load %arg14[%c16, %c0_26] : memref<64x512xf32, #tpu.memory_space<vmem>>, vector<8x512xf32>
    %59 = arith.truncf %56 : vector<8x128xf32> to vector<8x128xbf16>
    %cst_27 = arith.constant dense<0.000000e+00> : vector<8x512xf32>
    %60 = tpu.matmul %59, %13, %cst_27 {dimension_numbers = #tpu.dot_dimension_numbers<[1], [0], [0], [1], [0, 0, 1, 1], [], []>} : vector<8x128xbf16>, vector<128x512xbf16>, vector<8x512xf32> -> vector<8x512xf32>
    %61 = arith.addf %58, %60 : vector<8x512xf32>
    %62 = vector.extract_strided_slice %61 {offsets = [0, 0], sizes = [8, 384], strides = [1, 1]} : vector<8x512xf32> to vector<8x384xf32>
    %63 = arith.negf %62 : vector<8x384xf32>
    %64 = math.exp %63 : vector<8x384xf32>
    %cst_28 = arith.constant 1.000000e+00 : f32
    %65 = vector.broadcast %cst_28 : f32 to vector<8x384xf32>
    %66 = arith.addf %65, %64 : vector<8x384xf32>
    %67 = arith.divf %65, %66 : vector<8x384xf32>
    %68 = vector.extract_strided_slice %67 {offsets = [0, 0], sizes = [8, 128], strides = [1, 1]} : vector<8x384xf32> to vector<8x128xf32>
    %69 = vector.extract_strided_slice %67 {offsets = [0, 128], sizes = [8, 128], strides = [1, 1]} : vector<8x384xf32> to vector<8x128xf32>
    %70 = vector.extract_strided_slice %67 {offsets = [0, 256], sizes = [8, 128], strides = [1, 1]} : vector<8x384xf32> to vector<8x128xf32>
    %71 = vector.extract_strided_slice %61 {offsets = [0, 384], sizes = [8, 128], strides = [1, 1]} : vector<8x512xf32> to vector<8x128xf32>
    %72 = math.tanh %71 : vector<8x128xf32>
    %73 = arith.mulf %69, %54 : vector<8x128xf32>
    %74 = arith.mulf %68, %72 : vector<8x128xf32>
    %75 = arith.addf %73, %74 : vector<8x128xf32>
    %76 = math.tanh %75 : vector<8x128xf32>
    %77 = arith.mulf %70, %76 : vector<8x128xf32>
    %c16_29 = arith.constant 16 : index
    %c0_30 = arith.constant 0 : index
    %78 = vector.load %arg15[%c16_29, %c0_30] : memref<64x128xf32, #tpu.memory_space<vmem>>, vector<8x128xf32>
    tpu.vector_store %arg15[%c16_29, %c0_30], %77 {strides = array<i32>} : memref<64x128xf32, #tpu.memory_space<vmem>>, vector<8x128xf32>,
    %c24 = arith.constant 24 : index
    %c0_31 = arith.constant 0 : index
    %79 = vector.load %arg14[%c24, %c0_31] : memref<64x512xf32, #tpu.memory_space<vmem>>, vector<8x512xf32>
    %80 = arith.truncf %77 : vector<8x128xf32> to vector<8x128xbf16>
    %cst_32 = arith.constant dense<0.000000e+00> : vector<8x512xf32>
    %81 = tpu.matmul %80, %13, %cst_32 {dimension_numbers = #tpu.dot_dimension_numbers<[1], [0], [0], [1], [0, 0, 1, 1], [], []>} : vector<8x128xbf16>, vector<128x512xbf16>, vector<8x512xf32> -> vector<8x512xf32>
    %82 = arith.addf %79, %81 : vector<8x512xf32>
    %83 = vector.extract_strided_slice %82 {offsets = [0, 0], sizes = [8, 384], strides = [1, 1]} : vector<8x512xf32> to vector<8x384xf32>
    %84 = arith.negf %83 : vector<8x384xf32>
    %85 = math.exp %84 : vector<8x384xf32>
    %cst_33 = arith.constant 1.000000e+00 : f32
    %86 = vector.broadcast %cst_33 : f32 to vector<8x384xf32>
    %87 = arith.addf %86, %85 : vector<8x384xf32>
    %88 = arith.divf %86, %87 : vector<8x384xf32>
    %89 = vector.extract_strided_slice %88 {offsets = [0, 0], sizes = [8, 128], strides = [1, 1]} : vector<8x384xf32> to vector<8x128xf32>
    %90 = vector.extract_strided_slice %88 {offsets = [0, 128], sizes = [8, 128], strides = [1, 1]} : vector<8x384xf32> to vector<8x128xf32>
    %91 = vector.extract_strided_slice %88 {offsets = [0, 256], sizes = [8, 128], strides = [1, 1]} : vector<8x384xf32> to vector<8x128xf32>
    %92 = vector.extract_strided_slice %82 {offsets = [0, 384], sizes = [8, 128], strides = [1, 1]} : vector<8x512xf32> to vector<8x128xf32>
    %93 = math.tanh %92 : vector<8x128xf32>
    %94 = arith.mulf %90, %75 : vector<8x128xf32>
    %95 = arith.mulf %89, %93 : vector<8x128xf32>
    %96 = arith.addf %94, %95 : vector<8x128xf32>
    %97 = math.tanh %96 : vector<8x128xf32>
    %98 = arith.mulf %91, %97 : vector<8x128xf32>
    %c24_34 = arith.constant 24 : index
    %c0_35 = arith.constant 0 : index
    %99 = vector.load %arg15[%c24_34, %c0_35] : memref<64x128xf32, #tpu.memory_space<vmem>>, vector<8x128xf32>
    tpu.vector_store %arg15[%c24_34, %c0_35], %98 {strides = array<i32>} : memref<64x128xf32, #tpu.memory_space<vmem>>, vector<8x128xf32>,
    %c32 = arith.constant 32 : index
    %c0_36 = arith.constant 0 : index
    %100 = vector.load %arg14[%c32, %c0_36] : memref<64x512xf32, #tpu.memory_space<vmem>>, vector<8x512xf32>
    %101 = arith.truncf %98 : vector<8x128xf32> to vector<8x128xbf16>
    %cst_37 = arith.constant dense<0.000000e+00> : vector<8x512xf32>
    %102 = tpu.matmul %101, %13, %cst_37 {dimension_numbers = #tpu.dot_dimension_numbers<[1], [0], [0], [1], [0, 0, 1, 1], [], []>} : vector<8x128xbf16>, vector<128x512xbf16>, vector<8x512xf32> -> vector<8x512xf32>
    %103 = arith.addf %100, %102 : vector<8x512xf32>
    %104 = vector.extract_strided_slice %103 {offsets = [0, 0], sizes = [8, 384], strides = [1, 1]} : vector<8x512xf32> to vector<8x384xf32>
    %105 = arith.negf %104 : vector<8x384xf32>
    %106 = math.exp %105 : vector<8x384xf32>
    %cst_38 = arith.constant 1.000000e+00 : f32
    %107 = vector.broadcast %cst_38 : f32 to vector<8x384xf32>
    %108 = arith.addf %107, %106 : vector<8x384xf32>
    %109 = arith.divf %107, %108 : vector<8x384xf32>
    %110 = vector.extract_strided_slice %109 {offsets = [0, 0], sizes = [8, 128], strides = [1, 1]} : vector<8x384xf32> to vector<8x128xf32>
    %111 = vector.extract_strided_slice %109 {offsets = [0, 128], sizes = [8, 128], strides = [1, 1]} : vector<8x384xf32> to vector<8x128xf32>
    %112 = vector.extract_strided_slice %109 {offsets = [0, 256], sizes = [8, 128], strides = [1, 1]} : vector<8x384xf32> to vector<8x128xf32>
    %113 = vector.extract_strided_slice %103 {offsets = [0, 384], sizes = [8, 128], strides = [1, 1]} : vector<8x512xf32> to vector<8x128xf32>
    %114 = math.tanh %113 : vector<8x128xf32>
    %115 = arith.mulf %111, %96 : vector<8x128xf32>
    %116 = arith.mulf %110, %114 : vector<8x128xf32>
    %117 = arith.addf %115, %116 : vector<8x128xf32>
    %118 = math.tanh %117 : vector<8x128xf32>
    %119 = arith.mulf %112, %118 : vector<8x128xf32>
    %c32_39 = arith.constant 32 : index
    %c0_40 = arith.constant 0 : index
    %120 = vector.load %arg15[%c32_39, %c0_40] : memref<64x128xf32, #tpu.memory_space<vmem>>, vector<8x128xf32>
    tpu.vector_store %arg15[%c32_39, %c0_40], %119 {strides = array<i32>} : memref<64x128xf32, #tpu.memory_space<vmem>>, vector<8x128xf32>,
    %c40 = arith.constant 40 : index
    %c0_41 = arith.constant 0 : index
    %121 = vector.load %arg14[%c40, %c0_41] : memref<64x512xf32, #tpu.memory_space<vmem>>, vector<8x512xf32>
    %122 = arith.truncf %119 : vector<8x128xf32> to vector<8x128xbf16>
    %cst_42 = arith.constant dense<0.000000e+00> : vector<8x512xf32>
    %123 = tpu.matmul %122, %13, %cst_42 {dimension_numbers = #tpu.dot_dimension_numbers<[1], [0], [0], [1], [0, 0, 1, 1], [], []>} : vector<8x128xbf16>, vector<128x512xbf16>, vector<8x512xf32> -> vector<8x512xf32>
    %124 = arith.addf %121, %123 : vector<8x512xf32>
    %125 = vector.extract_strided_slice %124 {offsets = [0, 0], sizes = [8, 384], strides = [1, 1]} : vector<8x512xf32> to vector<8x384xf32>
    %126 = arith.negf %125 : vector<8x384xf32>
    %127 = math.exp %126 : vector<8x384xf32>
    %cst_43 = arith.constant 1.000000e+00 : f32
    %128 = vector.broadcast %cst_43 : f32 to vector<8x384xf32>
    %129 = arith.addf %128, %127 : vector<8x384xf32>
    %130 = arith.divf %128, %129 : vector<8x384xf32>
    %131 = vector.extract_strided_slice %130 {offsets = [0, 0], sizes = [8, 128], strides = [1, 1]} : vector<8x384xf32> to vector<8x128xf32>
    %132 = vector.extract_strided_slice %130 {offsets = [0, 128], sizes = [8, 128], strides = [1, 1]} : vector<8x384xf32> to vector<8x128xf32>
    %133 = vector.extract_strided_slice %130 {offsets = [0, 256], sizes = [8, 128], strides = [1, 1]} : vector<8x384xf32> to vector<8x128xf32>
    %134 = vector.extract_strided_slice %124 {offsets = [0, 384], sizes = [8, 128], strides = [1, 1]} : vector<8x512xf32> to vector<8x128xf32>
    %135 = math.tanh %134 : vector<8x128xf32>
    %136 = arith.mulf %132, %117 : vector<8x128xf32>
    %137 = arith.mulf %131, %135 : vector<8x128xf32>
    %138 = arith.addf %136, %137 : vector<8x128xf32>
    %139 = math.tanh %138 : vector<8x128xf32>
    %140 = arith.mulf %133, %139 : vector<8x128xf32>
    %c40_44 = arith.constant 40 : index
    %c0_45 = arith.constant 0 : index
    %141 = vector.load %arg15[%c40_44, %c0_45] : memref<64x128xf32, #tpu.memory_space<vmem>>, vector<8x128xf32>
    tpu.vector_store %arg15[%c40_44, %c0_45], %140 {strides = array<i32>} : memref<64x128xf32, #tpu.memory_space<vmem>>, vector<8x128xf32>,
    %c48 = arith.constant 48 : index
    %c0_46 = arith.constant 0 : index
    %142 = vector.load %arg14[%c48, %c0_46] : memref<64x512xf32, #tpu.memory_space<vmem>>, vector<8x512xf32>
    %143 = arith.truncf %140 : vector<8x128xf32> to vector<8x128xbf16>
    %cst_47 = arith.constant dense<0.000000e+00> : vector<8x512xf32>
    %144 = tpu.matmul %143, %13, %cst_47 {dimension_numbers = #tpu.dot_dimension_numbers<[1], [0], [0], [1], [0, 0, 1, 1], [], []>} : vector<8x128xbf16>, vector<128x512xbf16>, vector<8x512xf32> -> vector<8x512xf32>
    %145 = arith.addf %142, %144 : vector<8x512xf32>
    %146 = vector.extract_strided_slice %145 {offsets = [0, 0], sizes = [8, 384], strides = [1, 1]} : vector<8x512xf32> to vector<8x384xf32>
    %147 = arith.negf %146 : vector<8x384xf32>
    %148 = math.exp %147 : vector<8x384xf32>
    %cst_48 = arith.constant 1.000000e+00 : f32
    %149 = vector.broadcast %cst_48 : f32 to vector<8x384xf32>
    %150 = arith.addf %149, %148 : vector<8x384xf32>
    %151 = arith.divf %149, %150 : vector<8x384xf32>
    %152 = vector.extract_strided_slice %151 {offsets = [0, 0], sizes = [8, 128], strides = [1, 1]} : vector<8x384xf32> to vector<8x128xf32>
    %153 = vector.extract_strided_slice %151 {offsets = [0, 128], sizes = [8, 128], strides = [1, 1]} : vector<8x384xf32> to vector<8x128xf32>
    %154 = vector.extract_strided_slice %151 {offsets = [0, 256], sizes = [8, 128], strides = [1, 1]} : vector<8x384xf32> to vector<8x128xf32>
    %155 = vector.extract_strided_slice %145 {offsets = [0, 384], sizes = [8, 128], strides = [1, 1]} : vector<8x512xf32> to vector<8x128xf32>
    %156 = math.tanh %155 : vector<8x128xf32>
    %157 = arith.mulf %153, %138 : vector<8x128xf32>
    %158 = arith.mulf %152, %156 : vector<8x128xf32>
    %159 = arith.addf %157, %158 : vector<8x128xf32>
    %160 = math.tanh %159 : vector<8x128xf32>
    %161 = arith.mulf %154, %160 : vector<8x128xf32>
    %c48_49 = arith.constant 48 : index
    %c0_50 = arith.constant 0 : index
    %162 = vector.load %arg15[%c48_49, %c0_50] : memref<64x128xf32, #tpu.memory_space<vmem>>, vector<8x128xf32>
    tpu.vector_store %arg15[%c48_49, %c0_50], %161 {strides = array<i32>} : memref<64x128xf32, #tpu.memory_space<vmem>>, vector<8x128xf32>,
    %c56 = arith.constant 56 : index
    %c0_51 = arith.constant 0 : index
    %163 = vector.load %arg14[%c56, %c0_51] : memref<64x512xf32, #tpu.memory_space<vmem>>, vector<8x512xf32>
    %164 = arith.truncf %161 : vector<8x128xf32> to vector<8x128xbf16>
    %cst_52 = arith.constant dense<0.000000e+00> : vector<8x512xf32>
    %165 = tpu.matmul %164, %13, %cst_52 {dimension_numbers = #tpu.dot_dimension_numbers<[1], [0], [0], [1], [0, 0, 1, 1], [], []>} : vector<8x128xbf16>, vector<128x512xbf16>, vector<8x512xf32> -> vector<8x512xf32>
    %166 = arith.addf %163, %165 : vector<8x512xf32>
    %167 = vector.extract_strided_slice %166 {offsets = [0, 0], sizes = [8, 384], strides = [1, 1]} : vector<8x512xf32> to vector<8x384xf32>
    %168 = arith.negf %167 : vector<8x384xf32>
    %169 = math.exp %168 : vector<8x384xf32>
    %cst_53 = arith.constant 1.000000e+00 : f32
    %170 = vector.broadcast %cst_53 : f32 to vector<8x384xf32>
    %171 = arith.addf %170, %169 : vector<8x384xf32>
    %172 = arith.divf %170, %171 : vector<8x384xf32>
    %173 = vector.extract_strided_slice %172 {offsets = [0, 0], sizes = [8, 128], strides = [1, 1]} : vector<8x384xf32> to vector<8x128xf32>
    %174 = vector.extract_strided_slice %172 {offsets = [0, 128], sizes = [8, 128], strides = [1, 1]} : vector<8x384xf32> to vector<8x128xf32>
    %175 = vector.extract_strided_slice %172 {offsets = [0, 256], sizes = [8, 128], strides = [1, 1]} : vector<8x384xf32> to vector<8x128xf32>
    %176 = vector.extract_strided_slice %166 {offsets = [0, 384], sizes = [8, 128], strides = [1, 1]} : vector<8x512xf32> to vector<8x128xf32>
    %177 = math.tanh %176 : vector<8x128xf32>
    %178 = arith.mulf %174, %159 : vector<8x128xf32>
    %179 = arith.mulf %173, %177 : vector<8x128xf32>
    %180 = arith.addf %178, %179 : vector<8x128xf32>
    %181 = math.tanh %180 : vector<8x128xf32>
    %182 = arith.mulf %175, %181 : vector<8x128xf32>
    %c56_54 = arith.constant 56 : index
    %c0_55 = arith.constant 0 : index
    %183 = vector.load %arg15[%c56_54, %c0_55] : memref<64x128xf32, #tpu.memory_space<vmem>>, vector<8x128xf32>
    tpu.vector_store %arg15[%c56_54, %c0_55], %182 {strides = array<i32>} : memref<64x128xf32, #tpu.memory_space<vmem>>, vector<8x128xf32>,
    %c0_56 = arith.constant 0 : index
    %c0_57 = arith.constant 0 : index
    %184 = vector.load %arg12[%c0_56, %c0_57] : memref<8x128xf32, #tpu.memory_space<vmem>>, vector<8x128xf32>
    tpu.vector_store %arg12[%c0_56, %c0_57], %182 {strides = array<i32>} : memref<8x128xf32, #tpu.memory_space<vmem>>, vector<8x128xf32>,
    %c0_58 = arith.constant 0 : index
    %c0_59 = arith.constant 0 : index
    %185 = vector.load %arg13[%c0_58, %c0_59] : memref<8x128xf32, #tpu.memory_space<vmem>>, vector<8x128xf32>
    tpu.vector_store %arg13[%c0_58, %c0_59], %180 {strides = array<i32>} : memref<8x128xf32, #tpu.memory_space<vmem>>, vector<8x128xf32>,
    %c0_60 = arith.constant 0 : index
    %c0_61 = arith.constant 0 : index
    %186 = vector.load %arg15[%c0_60, %c0_61] : memref<64x128xf32, #tpu.memory_space<vmem>>, vector<64x128xf32>
    %187 = arith.truncf %186 : vector<64x128xf32> to vector<64x128xbf16>
    %c0_62 = arith.constant 0 : index
    %c0_63 = arith.constant 0 : index
    %188 = vector.load %arg5[%c0_62, %c0_63] : memref<128x128xbf16, #tpu.memory_space<vmem>>, vector<128x128xbf16>
    %cst_64 = arith.constant dense<0.000000e+00> : vector<64x128xf32>
    %189 = tpu.matmul %187, %188, %cst_64 {dimension_numbers = #tpu.dot_dimension_numbers<[1], [0], [0], [1], [0, 0, 1, 1], [], []>} : vector<64x128xbf16>, vector<128x128xbf16>, vector<64x128xf32> -> vector<64x128xf32>
    %c0_65 = arith.constant 0 : index
    %c0_66 = arith.constant 0 : index
    %190 = vector.load %arg6[%c0_65, %c0_66] : memref<1x128xf32, #tpu.memory_space<vmem>>, vector<1x128xf32>
    %191 = vector.broadcast %190 : vector<1x128xf32> to vector<64x128xf32>
    %192 = arith.addf %189, %191 : vector<64x128xf32>
    %193 = vector.shape_cast %192 : vector<64x128xf32> to vector<8x8x128xf32>
    %194 = tpu.transpose %193, [1, 0, 2] : vector<8x8x128xf32> -> vector<8x8x128xf32>
    %c0_67 = arith.constant 0 : index
    %c0_68 = arith.constant 0 : index
    %c0_69 = arith.constant 0 : index
    %195 = vector.load %arg9[%c0_67, %c0_68, %c0_69] : memref<8x8x128xf32, #tpu.memory_space<vmem>>, vector<8x8x128xf32>
    tpu.vector_store %arg9[%c0_67, %c0_68, %c0_69], %194 {strides = array<i32>} : memref<8x8x128xf32, #tpu.memory_space<vmem>>, vector<8x8x128xf32>,
    %c0_i32_70 = arith.constant 0 : i32
    %196 = arith.cmpi eq, %arg0, %c0_i32_70 : i32
    %197 = arith.extui %196 : i1 to i32
    %c0_i32_71 = arith.constant 0 : i32
    %198 = arith.cmpi ne, %197, %c0_i32_71 : i32
    scf.if %198 {
      %c0_72 = arith.constant 0 : index
      %c0_73 = arith.constant 0 : index
      %199 = vector.load %arg10[%c0_72, %c0_73] : memref<8x128xf32, #tpu.memory_space<vmem>>, vector<8x128xf32>
      tpu.vector_store %arg10[%c0_72, %c0_73], %182 {strides = array<i32>} : memref<8x128xf32, #tpu.memory_space<vmem>>, vector<8x128xf32>,
      %c0_74 = arith.constant 0 : index
      %c0_75 = arith.constant 0 : index
      %200 = vector.load %arg11[%c0_74, %c0_75] : memref<8x128xf32, #tpu.memory_space<vmem>>, vector<8x128xf32>
      tpu.vector_store %arg11[%c0_74, %c0_75], %180 {strides = array<i32>} : memref<8x128xf32, #tpu.memory_space<vmem>>, vector<8x128xf32>,
    } else {
    }
    return
  }
  func.func @transform_0(%arg0: i32) -> (i32, i32, i32) {
    %c0_i32 = arith.constant 0 : i32
    %c0_i32_0 = arith.constant 0 : i32
    %c0_i32_1 = arith.constant 0 : i32
    return %c0_i32, %arg0, %c0_i32_0 : i32, i32, i32
  }
  func.func @transform_1(%arg0: i32) -> (i32, i32) {
    %c0_i32 = arith.constant 0 : i32
    %c0_i32_0 = arith.constant 0 : i32
    %c0_i32_1 = arith.constant 0 : i32
    return %c0_i32, %c0_i32_0 : i32, i32
  }
  func.func @transform_2(%arg0: i32) -> (i32, i32) {
    %c0_i32 = arith.constant 0 : i32
    %c0_i32_0 = arith.constant 0 : i32
    %c0_i32_1 = arith.constant 0 : i32
    return %c0_i32, %c0_i32_0 : i32, i32
  }
  func.func @transform_3(%arg0: i32) -> (i32, i32) {
    %c0_i32 = arith.constant 0 : i32
    %c0_i32_0 = arith.constant 0 : i32
    %c0_i32_1 = arith.constant 0 : i32
    return %c0_i32, %c0_i32_0 : i32, i32
  }
  func.func @transform_4(%arg0: i32) -> (i32, i32) {
    %c0_i32 = arith.constant 0 : i32
    %c0_i32_0 = arith.constant 0 : i32
    %c0_i32_1 = arith.constant 0 : i32
    return %c0_i32, %c0_i32_0 : i32, i32
  }
  func.func @transform_5(%arg0: i32) -> (i32, i32) {
    %c0_i32 = arith.constant 0 : i32
    %c0_i32_0 = arith.constant 0 : i32
    %c0_i32_1 = arith.constant 0 : i32
    return %c0_i32, %c0_i32_0 : i32, i32
  }
  func.func @transform_6(%arg0: i32) -> (i32, i32) {
    %c0_i32 = arith.constant 0 : i32
    %c0_i32_0 = arith.constant 0 : i32
    %c0_i32_1 = arith.constant 0 : i32
    return %c0_i32, %c0_i32_0 : i32, i32
  }
  func.func @transform_7(%arg0: i32) -> (i32, i32) {
    %c0_i32 = arith.constant 0 : i32
    %c0_i32_0 = arith.constant 0 : i32
    %c0_i32_1 = arith.constant 0 : i32
    return %c0_i32, %c0_i32_0 : i32, i32
  }
  func.func @transform_8(%arg0: i32) -> (i32, i32, i32) {
    %c0_i32 = arith.constant 0 : i32
    %c0_i32_0 = arith.constant 0 : i32
    %c0_i32_1 = arith.constant 0 : i32
    return %c0_i32, %arg0, %c0_i32_0 : i32, i32, i32
  }
  func.func @transform_9(%arg0: i32) -> (i32, i32) {
    %c0_i32 = arith.constant 0 : i32
    %c0_i32_0 = arith.constant 0 : i32
    %c0_i32_1 = arith.constant 0 : i32
    return %c0_i32, %c0_i32_0 : i32, i32
  }
  func.func @transform_10(%arg0: i32) -> (i32, i32) {
    %c0_i32 = arith.constant 0 : i32
    %c0_i32_0 = arith.constant 0 : i32
    %c0_i32_1 = arith.constant 0 : i32
    return %c0_i32, %c0_i32_0 : i32, i32
  }
}

</mosaic_0001>

<llo_original>
// kernel: generator_forward.1
$region0: #{generator_forward.1}
  #allocation0 [shape = 'u32[]', space=smem, size = 0x4, offset = 0x4, fixed_abs, tag = 'smem constant byte address 0x4 - core index']
  #allocation1 [shape = 'u32[72,128]{1,0:T(1,128)}', space=vmem, size = 0x9000, scoped, tag = 'internal scratch']
  #allocation2 [shape = 'f32[8,128]{1,0:T(8,128)}', space=vmem, size = 0x1000, scoped, tag = 'scratch operand']
  #allocation3 [shape = 'f32[8,128]{1,0:T(8,128)}', space=vmem, size = 0x1000, scoped, tag = 'scratch operand']
  #allocation4 [shape = 'f32[64,512]{1,0:T(8,128)}', space=vmem, size = 0x20000, scoped, tag = 'scratch operand']
  #allocation5 [shape = 'f32[64,128]{1,0:T(8,128)}', space=vmem, size = 0x8000, scoped, tag = 'scratch operand']
  %s0 = inlined_call_operand.vmem [shape: f32[8,8,32], index: 0, kind: input, shape index: {}]
  %s1 = inlined_call_operand.vmem [shape: bf16[32,512], index: 1, kind: input, shape index: {}]
  %s2 = inlined_call_operand.hbm [shape: bf16[128,512], index: 2, kind: input, shape index: {}]
  %s3 = inlined_call_operand.vmem [shape: f32[1,512], index: 3, kind: input, shape index: {}]
  %s4 = inlined_call_operand.vmem [shape: bf16[128,128], index: 4, kind: input, shape index: {}]
  %s5 = inlined_call_operand.vmem [shape: f32[1,128], index: 5, kind: input, shape index: {}]
  %s6 = inlined_call_operand.vmem [shape: f32[8,128], index: 6, kind: input, shape index: {}, may-alias: {6,9}]
  %s7 = inlined_call_operand.vmem [shape: f32[8,128], index: 7, kind: input, shape index: {}, may-alias: {7,10}]
  %s8 = inlined_call_operand.vmem [shape: f32[8,8,128], index: 8, kind: output, shape index: {0}]
  %s9 = inlined_call_operand.vmem [shape: f32[8,128], index: 9, kind: output, shape index: {1}, may-alias: {6,9}]
  %s10 = inlined_call_operand.vmem [shape: f32[8,128], index: 10, kind: output, shape index: {2}, may-alias: {7,10}]
  %11 = xla_tuple %s8, %s9, %s10
  %s12 = sld [smem:[#allocation0]]
  $region70: #{generator_forward.1} parent=0
    _
  %s14 = ssub.s32 1, %s12
  %s15 = scalar_select 0, %s14, %s12
  $region1: #{generator_forward.1} parent=0
    #allocation6 [shape = 'u8[131072]{0}', space=vmem, size = 0x20000, scoped, tag = 'input window, operand 2, single buffered']
    #allocation7 [shape = 's32[1]{0}', space=sflag, size = 0x4, scoped, tag = 'scoped memory for generator_forward.1']
    %16 = vsyncpa [#allocation7], 0
    // Predicated region
    $region2: #{generator_forward.1} parent=1 // pred_check
      _
    $region3: #{generator_forward.1} parent=1 // pred_check_branch
      %18 = sbr.rel (0) target = $region5
    $region4: #{generator_forward.1} parent=1 // pred_region
      _
    $region5: #{generator_forward.1} parent=1 // pred_fallthru
      _
    // Predicated region
    $region6: #{generator_forward.1} parent=1 // pred_check
      _
    $region7: #{generator_forward.1} parent=1 // pred_check_branch
      %20 = sbr.rel (0) target = $region9
    $region8: #{generator_forward.1} parent=1 // pred_region
      _
    $region9: #{generator_forward.1} parent=1 // pred_fallthru
      _
    // Predicated region
    $region10: #{generator_forward.1} parent=1 // pred_check
      _
    $region11: #{generator_forward.1} parent=1 // pred_check_branch
      %22 = sbr.rel (0) target = $region13
    $region12: #{generator_forward.1} parent=1 // pred_region
      %24 = vsyncadd [#allocation7], 0
      %s25 = sshll.u32 %s2, 4
      %s26 = int_to_ptr.hbm [resolvable:$true] %s25
      %s27 = sshll.u32 [#allocation6], 4
      %s28 = int_to_ptr.vmem [resolvable:$true] %s27
      %33 = dma.hbm_to_vmem [thread:$0]  %s26, 4096, %s28, [#allocation7], 256, 256, 16
    $region13: #{generator_forward.1} parent=1 // pred_fallthru
      _
    // Predicated region
    $region14: #{generator_forward.1} parent=1 // pred_check
      _
    $region15: #{generator_forward.1} parent=1 // pred_check_branch
      %35 = sbr.rel (0) target = $region17
    $region16: #{generator_forward.1} parent=1 // pred_region
      _
    $region17: #{generator_forward.1} parent=1 // pred_fallthru
      _
    // Predicated region
    $region18: #{generator_forward.1} parent=1 // pred_check
      _
    $region19: #{generator_forward.1} parent=1 // pred_check_branch
      %37 = sbr.rel (0) target = $region21
    $region20: #{generator_forward.1} parent=1 // pred_region
      _
    $region21: #{generator_forward.1} parent=1 // pred_fallthru
      _
    // Predicated region
    $region22: #{generator_forward.1} parent=1 // pred_check
      _
    $region23: #{generator_forward.1} parent=1 // pred_check_branch
      %39 = sbr.rel (0) target = $region25
    $region24: #{generator_forward.1} parent=1 // pred_region
      _
    $region25: #{generator_forward.1} parent=1 // pred_fallthru
      _
    // Predicated region
    $region26: #{generator_forward.1} parent=1 // pred_check
      _
    $region27: #{generator_forward.1} parent=1 // pred_check_branch
      %41 = sbr.rel (0) target = $region29
    $region28: #{generator_forward.1} parent=1 // pred_region
      _
    $region29: #{generator_forward.1} parent=1 // pred_fallthru
      _
    // Predicated region
    $region30: #{generator_forward.1} parent=1 // pred_check
      _
    $region31: #{generator_forward.1} parent=1 // pred_check_branch
      %43 = sbr.rel (0) target = $region33
    $region32: #{generator_forward.1} parent=1 // pred_region
      _
    $region33: #{generator_forward.1} parent=1 // pred_fallthru
      _
    // Predicated region
    $region34: #{generator_forward.1} parent=1 // pred_check
      _
    $region35: #{generator_forward.1} parent=1 // pred_check_branch
      %45 = sbr.rel (0) target = $region37
    $region36: #{generator_forward.1} parent=1 // pred_region
      %47 = dma.done [#allocation7], 4096
    $region37: #{generator_forward.1} parent=1 // pred_fallthru
      _
    %p49 = scmp.eq.s32.totalorder 0, 0
    // Predicated region
    $region38: #{generator_forward.1} parent=1 // pred_check
      %p50 = pneg %p49
    $region39: #{generator_forward.1} parent=1 // pred_check_branch
      %52 = sbr.rel (%p50) target = $region41
    $region40: #{generator_forward.1} parent=1 // pred_region
      %v53 = vld [vmem:[%s6] sm:$0xff]
      %54 = vst [vmem:[#allocation2] sm:$0xff] %v53
      %v55 = vld [vmem:[%s7] sm:$0xff]
      %56 = vst [vmem:[#allocation3] sm:$0xff] %v55
    $region41: #{generator_forward.1} parent=1 // pred_fallthru
      _
    %v57 = vld [vmem:[%s0] sm:$0xff]
    %v58 = vld [vmem:[%s0 + $0x8] sm:$0xff]
    %v59 = vld [vmem:[%s0 + $0x10] sm:$0xff]
    %v60 = vld [vmem:[%s0 + $0x18] sm:$0xff]
    %v61 = vld [vmem:[%s0 + $0x20] sm:$0xff]
    %v62 = vld [vmem:[%s0 + $0x28] sm:$0xff]
    %v63 = vld [vmem:[%s0 + $0x30] sm:$0xff]
    %v64 = vld [vmem:[%s0 + $0x38] sm:$0xff]
    %v65 = vrot.slane %v59, 4
    %vm66 = vcmask 1047556
    %v67 = vsel %vm66, %v65, %v57
    %v68 = vrot.slane %v57, 4
    %v69 = vsel %vm66, %v59, %v68
    %v71 = vunpack.c.l.s4 1983009808
    %v72 = vunpack.c.0.s8 %v71
    %v73 = vperm.slane %v67, %v72
    %v75 = vunpack.c.l.s4 1983009808
    %v76 = vunpack.c.0.s8 %v75
    %v77 = vperm.slane %v69, %v76
    %v78 = vrot.slane %v60, 4
    %v79 = vsel %vm66, %v78, %v58
    %v80 = vrot.slane %v58, 4
    %v81 = vsel %vm66, %v60, %v80
    %v83 = vunpack.c.l.s4 1983009808
    %v84 = vunpack.c.0.s8 %v83
    %v85 = vperm.slane %v79, %v84
    %v87 = vunpack.c.l.s4 1983009808
    %v88 = vunpack.c.0.s8 %v87
    %v89 = vperm.slane %v81, %v88
    %v90 = vrot.slane %v63, 4
    %v91 = vsel %vm66, %v90, %v61
    %v92 = vrot.slane %v61, 4
    %v93 = vsel %vm66, %v63, %v92
    %v95 = vunpack.c.l.s4 1983009808
    %v96 = vunpack.c.0.s8 %v95
    %v97 = vperm.slane %v91, %v96
    %v99 = vunpack.c.l.s4 1983009808
    %v100 = vunpack.c.0.s8 %v99
    %v101 = vperm.slane %v93, %v100
    %v102 = vrot.slane %v64, 4
    %v103 = vsel %vm66, %v102, %v62
    %v104 = vrot.slane %v62, 4
    %v105 = vsel %vm66, %v64, %v104
    %v107 = vunpack.c.l.s4 1983009808
    %v108 = vunpack.c.0.s8 %v107
    %v109 = vperm.slane %v103, %v108
    %v111 = vunpack.c.l.s4 1983009808
    %v112 = vunpack.c.0.s8 %v111
    %v113 = vperm.slane %v105, %v112
    %v114 = vrot.slane %v85, 4
    %v115 = vsel %vm66, %v114, %v73
    %v116 = vrot.slane %v73, 4
    %v117 = vsel %vm66, %v85, %v116
    %v119 = vunpack.c.l.s4 1934713408
    %v120 = vunpack.c.0.s8 %v119
    %v121 = vperm.slane %v115, %v120
    %v123 = vunpack.c.l.s4 1934713408
    %v124 = vunpack.c.0.s8 %v123
    %v125 = vperm.slane %v117, %v124
    %v126 = vrot.slane %v89, 4
    %v127 = vsel %vm66, %v126, %v77
    %v128 = vrot.slane %v77, 4
    %v129 = vsel %vm66, %v89, %v128
    %v131 = vunpack.c.l.s4 1934713408
    %v132 = vunpack.c.0.s8 %v131
    %v133 = vperm.slane %v127, %v132
    %v135 = vunpack.c.l.s4 1934713408
    %v136 = vunpack.c.0.s8 %v135
    %v137 = vperm.slane %v129, %v136
    %v138 = vrot.slane %v109, 4
    %v139 = vsel %vm66, %v138, %v97
    %v140 = vrot.slane %v97, 4
    %v141 = vsel %vm66, %v109, %v140
    %v143 = vunpack.c.l.s4 1934713408
    %v144 = vunpack.c.0.s8 %v143
    %v145 = vperm.slane %v139, %v144
    %v147 = vunpack.c.l.s4 1934713408
    %v148 = vunpack.c.0.s8 %v147
    %v149 = vperm.slane %v141, %v148
    %v150 = vrot.slane %v113, 4
    %v151 = vsel %vm66, %v150, %v101
    %v152 = vrot.slane %v101, 4
    %v153 = vsel %vm66, %v113, %v152
    %v155 = vunpack.c.l.s4 1934713408
    %v156 = vunpack.c.0.s8 %v155
    %v157 = vperm.slane %v151, %v156
    %v159 = vunpack.c.l.s4 1934713408
    %v160 = vunpack.c.0.s8 %v159
    %v161 = vperm.slane %v153, %v160
    %v162 = vrot.slane %v145, 4
    %v163 = vsel %vm66, %v162, %v121
    %v164 = vrot.slane %v121, 4
    %v165 = vsel %vm66, %v145, %v164
    %v166 = vrot.slane %v149, 4
    %v167 = vsel %vm66, %v166, %v125
    %v168 = vrot.slane %v125, 4
    %v169 = vsel %vm66, %v149, %v168
    %v170 = vrot.slane %v157, 4
    %v171 = vsel %vm66, %v170, %v133
    %v172 = vrot.slane %v133, 4
    %v173 = vsel %vm66, %v157, %v172
    %v174 = vrot.slane %v161, 4
    %v175 = vsel %vm66, %v174, %v137
    %v176 = vrot.slane %v137, 4
    %v177 = vsel %vm66, %v161, %v176
    %v178 = vpack.c.bf16 %v165, %v163
    %v179 = vpack.c.bf16 %v169, %v167
    %v180 = vpack.c.bf16 %v173, %v171
    %v181 = vpack.c.bf16 %v177, %v175
    %v182 = vld [vmem:[%s1] sm:$0xff]
    %v183 = vld [vmem:[%s1 + $0x8] sm:$0xff]
    %v184 = vld [vmem:[%s1 + $0x10] sm:$0xff]
    %v185 = vld [vmem:[%s1 + $0x18] sm:$0xff]
    %v186 = vld [vmem:[%s1 + $0x20] sm:$0xff]
    %v187 = vld [vmem:[%s1 + $0x28] sm:$0xff]
    %v188 = vld [vmem:[%s1 + $0x30] sm:$0xff]
    %v189 = vld [vmem:[%s1 + $0x38] sm:$0xff]
    %v190 = vld [vmem:[%s3] sm:$0xf]
    %v192 = vperm.slane %v190, 0
    %v193 = vperm.slane %v190, 1
    %v194 = vperm.slane %v190, 2
    %v195 = vperm.slane %v190, 3
    %v208 = vunpack.c.l.b16 %v182
    %v209 = vunpack.c.h.b16 %v182
    %v210 = vunpack.c.l.b16 %v183
    %v211 = vunpack.c.h.b16 %v183
    %v212 = vunpack.c.l.b16 %v184
    %v213 = vunpack.c.h.b16 %v184
    %v214 = vunpack.c.l.b16 %v185
    %v215 = vunpack.c.h.b16 %v185
    %v216 = vunpack.c.l.b16 %v186
    %v217 = vunpack.c.h.b16 %v186
    %v218 = vunpack.c.l.b16 %v187
    %v219 = vunpack.c.h.b16 %v187
    %v220 = vunpack.c.l.b16 %v188
    %v221 = vunpack.c.h.b16 %v188
    %v222 = vunpack.c.l.b16 %v189
    %v223 = vunpack.c.h.b16 %v189
    %v224 = vpack.c.b16 %v212, %v208
    %v225 = vpack.c.b16 %v213, %v209
    %v226 = vpack.c.b16 %v214, %v210
    %v227 = vpack.c.b16 %v215, %v211
    %v228 = vpack.c.b16 %v220, %v216
    %v229 = vpack.c.b16 %v221, %v217
    %v230 = vpack.c.b16 %v222, %v218
    %v231 = vpack.c.b16 %v223, %v219
    %vm240 = vcmask 261120
    %v242 = vsel %vm240, %v178, 0
    %v245 = vsel %vm240, %v179, 0
    %v248 = vsel %vm240, %v180, 0
    %v251 = vsel %vm240, %v181, 0
    %253 = vmatpush.bf16.msra.mxu0 0
    %254 = vmatpush.bf16.msra.mxu0 0
    %255 = vmatpush.bf16.msra.mxu0 0
    %256 = vmatpush.bf16.msra.mxu0 0
    %257 = vmatpush.bf16.msra.mxu0 0
    %258 = vmatpush.bf16.msra.mxu0 0
    %259 = vmatpush.bf16.msra.mxu0 %v228
    %260 = vmatpush.bf16.msra.mxu0 %v224
    %261 = vmatmul.bf16.gmra.mxu0 %v242
    %v262 = vpop.f32.mrf.mxu0
    %v263 = vadd.f32 %v192, %v262
    %v264 = vpop.f32.mrf.mxu0
    %v265 = vadd.f32 %v192, %v264
    %266 = vmatmul.bf16.gmra.mxu0 %v245
    %v267 = vpop.f32.mrf.mxu0
    %v268 = vadd.f32 %v192, %v267
    %v269 = vpop.f32.mrf.mxu0
    %v270 = vadd.f32 %v192, %v269
    %271 = vmatmul.bf16.gmra.mxu0 %v248
    %v272 = vpop.f32.mrf.mxu0
    %v273 = vadd.f32 %v192, %v272
    %v274 = vpop.f32.mrf.mxu0
    %v275 = vadd.f32 %v192, %v274
    %276 = vmatmul.bf16.gmra.mxu0 %v251
    %v277 = vpop.f32.mrf.mxu0
    %v278 = vadd.f32 %v192, %v277
    %v279 = vpop.f32.mrf.mxu0
    %v280 = vadd.f32 %v192, %v279
    %281 = vdwg.mxu0
    %282 = vmatpush.bf16.msra.mxu0 0
    %283 = vmatpush.bf16.msra.mxu0 0
    %284 = vmatpush.bf16.msra.mxu0 0
    %285 = vmatpush.bf16.msra.mxu0 0
    %286 = vmatpush.bf16.msra.mxu0 0
    %287 = vmatpush.bf16.msra.mxu0 0
    %288 = vmatpush.bf16.msra.mxu0 %v229
    %289 = vmatpush.bf16.msra.mxu0 %v225
    %290 = vmatmul.bf16.gmra.mxu0 %v242
    %v291 = vpop.f32.mrf.mxu0
    %v292 = vadd.f32 %v193, %v291
    %v293 = vpop.f32.mrf.mxu0
    %v294 = vadd.f32 %v193, %v293
    %295 = vmatmul.bf16.gmra.mxu0 %v245
    %v296 = vpop.f32.mrf.mxu0
    %v297 = vadd.f32 %v193, %v296
    %v298 = vpop.f32.mrf.mxu0
    %v299 = vadd.f32 %v193, %v298
    %300 = vmatmul.bf16.gmra.mxu0 %v248
    %v301 = vpop.f32.mrf.mxu0
    %v302 = vadd.f32 %v193, %v301
    %v303 = vpop.f32.mrf.mxu0
    %v304 = vadd.f32 %v193, %v303
    %305 = vmatmul.bf16.gmra.mxu0 %v251
    %v306 = vpop.f32.mrf.mxu0
    %v307 = vadd.f32 %v193, %v306
    %v308 = vpop.f32.mrf.mxu0
    %v309 = vadd.f32 %v193, %v308
    %310 = vdwg.mxu0
    %311 = vmatpush.bf16.msra.mxu0 0
    %312 = vmatpush.bf16.msra.mxu0 0
    %313 = vmatpush.bf16.msra.mxu0 0
    %314 = vmatpush.bf16.msra.mxu0 0
    %315 = vmatpush.bf16.msra.mxu0 0
    %316 = vmatpush.bf16.msra.mxu0 0
    %317 = vmatpush.bf16.msra.mxu0 %v230
    %318 = vmatpush.bf16.msra.mxu0 %v226
    %319 = vmatmul.bf16.gmra.mxu0 %v242
    %v320 = vpop.f32.mrf.mxu0
    %v321 = vadd.f32 %v194, %v320
    %v322 = vpop.f32.mrf.mxu0
    %v323 = vadd.f32 %v194, %v322
    %324 = vmatmul.bf16.gmra.mxu0 %v245
    %v325 = vpop.f32.mrf.mxu0
    %v326 = vadd.f32 %v194, %v325
    %v327 = vpop.f32.mrf.mxu0
    %v328 = vadd.f32 %v194, %v327
    %329 = vmatmul.bf16.gmra.mxu0 %v248
    %v330 = vpop.f32.mrf.mxu0
    %v331 = vadd.f32 %v194, %v330
    %v332 = vpop.f32.mrf.mxu0
    %v333 = vadd.f32 %v194, %v332
    %334 = vmatmul.bf16.gmra.mxu0 %v251
    %v335 = vpop.f32.mrf.mxu0
    %v336 = vadd.f32 %v194, %v335
    %v337 = vpop.f32.mrf.mxu0
    %v338 = vadd.f32 %v194, %v337
    %339 = vdwg.mxu0
    %340 = vmatpush.bf16.msra.mxu0 0
    %341 = vmatpush.bf16.msra.mxu0 0
    %342 = vmatpush.bf16.msra.mxu0 0
    %343 = vmatpush.bf16.msra.mxu0 0
    %344 = vmatpush.bf16.msra.mxu0 0
    %345 = vmatpush.bf16.msra.mxu0 0
    %346 = vmatpush.bf16.msra.mxu0 %v231
    %347 = vmatpush.bf16.msra.mxu0 %v227
    %348 = vmatmul.bf16.gmra.mxu0 %v242
    %v349 = vpop.f32.mrf.mxu0
    %v350 = vadd.f32 %v195, %v349
    %v351 = vpop.f32.mrf.mxu0
    %v352 = vadd.f32 %v195, %v351
    %353 = vmatmul.bf16.gmra.mxu0 %v245
    %v354 = vpop.f32.mrf.mxu0
    %v355 = vadd.f32 %v195, %v354
    %v356 = vpop.f32.mrf.mxu0
    %v357 = vadd.f32 %v195, %v356
    %358 = vmatmul.bf16.gmra.mxu0 %v248
    %v359 = vpop.f32.mrf.mxu0
    %v360 = vadd.f32 %v195, %v359
    %v361 = vpop.f32.mrf.mxu0
    %v362 = vadd.f32 %v195, %v361
    %363 = vmatmul.bf16.gmra.mxu0 %v251
    %v364 = vpop.f32.mrf.mxu0
    %v365 = vadd.f32 %v195, %v364
    %v366 = vpop.f32.mrf.mxu0
    %v367 = vadd.f32 %v195, %v366
    %368 = vdwg.mxu0
    %369 = vst [vmem:[#allocation4] sm:$0xff] %v263
    %370 = vst [vmem:[#allocation4 + $0x8] sm:$0xff] %v292
    %371 = vst [vmem:[#allocation4 + $0x10] sm:$0xff] %v321
    %372 = vst [vmem:[#allocation4 + $0x18] sm:$0xff] %v350
    %373 = vst [vmem:[#allocation4 + $0x20] sm:$0xff] %v265
    %374 = vst [vmem:[#allocation4 + $0x28] sm:$0xff] %v294
    %375 = vst [vmem:[#allocation4 + $0x30] sm:$0xff] %v323
    %376 = vst [vmem:[#allocation4 + $0x38] sm:$0xff] %v352
    %377 = vst [vmem:[#allocation4 + $0x40] sm:$0xff] %v268
    %378 = vst [vmem:[#allocation4 + $0x48] sm:$0xff] %v297
    %379 = vst [vmem:[#allocation4 + $0x50] sm:$0xff] %v326
    %380 = vst [vmem:[#allocation4 + $0x58] sm:$0xff] %v355
    %381 = vst [vmem:[#allocation4 + $0x60] sm:$0xff] %v270
    %382 = vst [vmem:[#allocation4 + $0x68] sm:$0xff] %v299
    %383 = vst [vmem:[#allocation4 + $0x70] sm:$0xff] %v328
    %384 = vst [vmem:[#allocation4 + $0x78] sm:$0xff] %v357
    %385 = vst [vmem:[#allocation4 + $0x80] sm:$0xff] %v273
    %386 = vst [vmem:[#allocation4 + $0x88] sm:$0xff] %v302
    %387 = vst [vmem:[#allocation4 + $0x90] sm:$0xff] %v331
    %388 = vst [vmem:[#allocation4 + $0x98] sm:$0xff] %v360
    %389 = vst [vmem:[#allocation4 + $0xa0] sm:$0xff] %v275
    %390 = vst [vmem:[#allocation4 + $0xa8] sm:$0xff] %v304
    %391 = vst [vmem:[#allocation4 + $0xb0] sm:$0xff] %v333
    %392 = vst [vmem:[#allocation4 + $0xb8] sm:$0xff] %v362
    %393 = vst [vmem:[#allocation4 + $0xc0] sm:$0xff] %v278
    %394 = vst [vmem:[#allocation4 + $0xc8] sm:$0xff] %v307
    %395 = vst [vmem:[#allocation4 + $0xd0] sm:$0xff] %v336
    %396 = vst [vmem:[#allocation4 + $0xd8] sm:$0xff] %v365
    %397 = vst [vmem:[#allocation4 + $0xe0] sm:$0xff] %v280
    %398 = vst [vmem:[#allocation4 + $0xe8] sm:$0xff] %v309
    %399 = vst [vmem:[#allocation4 + $0xf0] sm:$0xff] %v338
    %400 = vst [vmem:[#allocation4 + $0xf8] sm:$0xff] %v367
    %v401 = vld [vmem:[#allocation6] sm:$0xff]
    %v402 = vld [vmem:[#allocation6 + $0x8] sm:$0xff]
    %v403 = vld [vmem:[#allocation6 + $0x10] sm:$0xff]
    %v404 = vld [vmem:[#allocation6 + $0x18] sm:$0xff]
    %v405 = vld [vmem:[#allocation6 + $0x20] sm:$0xff]
    %v406 = vld [vmem:[#allocation6 + $0x28] sm:$0xff]
    %v407 = vld [vmem:[#allocation6 + $0x30] sm:$0xff]
    %v408 = vld [vmem:[#allocation6 + $0x38] sm:$0xff]
    %v409 = vld [vmem:[#allocation6 + $0x40] sm:$0xff]
    %v410 = vld [vmem:[#allocation6 + $0x48] sm:$0xff]
    %v411 = vld [vmem:[#allocation6 + $0x50] sm:$0xff]
    %v412 = vld [vmem:[#allocation6 + $0x58] sm:$0xff]
    %v413 = vld [vmem:[#allocation6 + $0x60] sm:$0xff]
    %v414 = vld [vmem:[#allocation6 + $0x68] sm:$0xff]
    %v415 = vld [vmem:[#allocation6 + $0x70] sm:$0xff]
    %v416 = vld [vmem:[#allocation6 + $0x78] sm:$0xff]
    %v417 = vld [vmem:[#allocation6 + $0x80] sm:$0xff]
    %v418 = vld [vmem:[#allocation6 + $0x88] sm:$0xff]
    %v419 = vld [vmem:[#allocation6 + $0x90] sm:$0xff]
    %v420 = vld [vmem:[#allocation6 + $0x98] sm:$0xff]
    %v421 = vld [vmem:[#allocation6 + $0xa0] sm:$0xff]
    %v422 = vld [vmem:[#allocation6 + $0xa8] sm:$0xff]
    %v423 = vld [vmem:[#allocation6 + $0xb0] sm:$0xff]
    %v424 = vld [vmem:[#allocation6 + $0xb8] sm:$0xff]
    %v425 = vld [vmem:[#allocation6 + $0xc0] sm:$0xff]
    %v426 = vld [vmem:[#allocation6 + $0xc8] sm:$0xff]
    %v427 = vld [vmem:[#allocation6 + $0xd0] sm:$0xff]
    %v428 = vld [vmem:[#allocation6 + $0xd8] sm:$0xff]
    %v429 = vld [vmem:[#allocation6 + $0xe0] sm:$0xff]
    %v430 = vld [vmem:[#allocation6 + $0xe8] sm:$0xff]
    %v431 = vld [vmem:[#allocation6 + $0xf0] sm:$0xff]
    %v432 = vld [vmem:[#allocation6 + $0xf8] sm:$0xff]
    %v433 = vld [vmem:[#allocation2] sm:$0xff]
    %v434 = vld [vmem:[#allocation3] sm:$0xff]
    %v435 = vld [vmem:[#allocation4] sm:$0xff]
    %v436 = vld [vmem:[#allocation4 + $0x8] sm:$0xff]
    %v437 = vld [vmem:[#allocation4 + $0x10] sm:$0xff]
    %v438 = vld [vmem:[#allocation4 + $0x18] sm:$0xff]
    %v439 = vpack.c.bf16 %v433, %v433
    %v472 = vunpack.c.l.b16 %v401
    %v473 = vunpack.c.h.b16 %v401
    %v474 = vunpack.c.l.b16 %v402
    %v475 = vunpack.c.h.b16 %v402
    %v476 = vunpack.c.l.b16 %v403
    %v477 = vunpack.c.h.b16 %v403
    %v478 = vunpack.c.l.b16 %v404
    %v479 = vunpack.c.h.b16 %v404
    %v480 = vunpack.c.l.b16 %v405
    %v481 = vunpack.c.h.b16 %v405
    %v482 = vunpack.c.l.b16 %v406
    %v483 = vunpack.c.h.b16 %v406
    %v484 = vunpack.c.l.b16 %v407
    %v485 = vunpack.c.h.b16 %v407
    %v486 = vunpack.c.l.b16 %v408
    %v487 = vunpack.c.h.b16 %v408
    %v488 = vunpack.c.l.b16 %v409
    %v489 = vunpack.c.h.b16 %v409
    %v490 = vunpack.c.l.b16 %v410
    %v491 = vunpack.c.h.b16 %v410
    %v492 = vunpack.c.l.b16 %v411
    %v493 = vunpack.c.h.b16 %v411
    %v494 = vunpack.c.l.b16 %v412
    %v495 = vunpack.c.h.b16 %v412
    %v496 = vunpack.c.l.b16 %v413
    %v497 = vunpack.c.h.b16 %v413
    %v498 = vunpack.c.l.b16 %v414
    %v499 = vunpack.c.h.b16 %v414
    %v500 = vunpack.c.l.b16 %v415
    %v501 = vunpack.c.h.b16 %v415
    %v502 = vunpack.c.l.b16 %v416
    %v503 = vunpack.c.h.b16 %v416
    %v504 = vunpack.c.l.b16 %v417
    %v505 = vunpack.c.h.b16 %v417
    %v506 = vunpack.c.l.b16 %v418
    %v507 = vunpack.c.h.b16 %v418
    %v508 = vunpack.c.l.b16 %v419
    %v509 = vunpack.c.h.b16 %v419
    %v510 = vunpack.c.l.b16 %v420
    %v511 = vunpack.c.h.b16 %v420
    %v512 = vunpack.c.l.b16 %v421
    %v513 = vunpack.c.h.b16 %v421
    %v514 = vunpack.c.l.b16 %v422
    %v515 = vunpack.c.h.b16 %v422
    %v516 = vunpack.c.l.b16 %v423
    %v517 = vunpack.c.h.b16 %v423
    %v518 = vunpack.c.l.b16 %v424
    %v519 = vunpack.c.h.b16 %v424
    %v520 = vunpack.c.l.b16 %v425
    %v521 = vunpack.c.h.b16 %v425
    %v522 = vunpack.c.l.b16 %v426
    %v523 = vunpack.c.h.b16 %v426
    %v524 = vunpack.c.l.b16 %v427
    %v525 = vunpack.c.h.b16 %v427
    %v526 = vunpack.c.l.b16 %v428
    %v527 = vunpack.c.h.b16 %v428
    %v528 = vunpack.c.l.b16 %v429
    %v529 = vunpack.c.h.b16 %v429
    %v530 = vunpack.c.l.b16 %v430
    %v531 = vunpack.c.h.b16 %v430
    %v532 = vunpack.c.l.b16 %v431
    %v533 = vunpack.c.h.b16 %v431
    %v534 = vunpack.c.l.b16 %v432
    %v535 = vunpack.c.h.b16 %v432
    %v536 = vpack.c.b16 %v476, %v472
    %v537 = vpack.c.b16 %v477, %v473
    %v538 = vpack.c.b16 %v478, %v474
    %v539 = vpack.c.b16 %v479, %v475
    %v540 = vpack.c.b16 %v484, %v480
    %v541 = vpack.c.b16 %v485, %v481
    %v542 = vpack.c.b16 %v486, %v482
    %v543 = vpack.c.b16 %v487, %v483
    %v544 = vpack.c.b16 %v492, %v488
    %v545 = vpack.c.b16 %v493, %v489
    %v546 = vpack.c.b16 %v494, %v490
    %v547 = vpack.c.b16 %v495, %v491
    %v548 = vpack.c.b16 %v500, %v496
    %v549 = vpack.c.b16 %v501, %v497
    %v550 = vpack.c.b16 %v502, %v498
    %v551 = vpack.c.b16 %v503, %v499
    %v552 = vpack.c.b16 %v508, %v504
    %v553 = vpack.c.b16 %v509, %v505
    %v554 = vpack.c.b16 %v510, %v506
    %v555 = vpack.c.b16 %v511, %v507
    %v556 = vpack.c.b16 %v516, %v512
    %v557 = vpack.c.b16 %v517, %v513
    %v558 = vpack.c.b16 %v518, %v514
    %v559 = vpack.c.b16 %v519, %v515
    %v560 = vpack.c.b16 %v524, %v520
    %v561 = vpack.c.b16 %v525, %v521
    %v562 = vpack.c.b16 %v526, %v522
    %v563 = vpack.c.b16 %v527, %v523
    %v564 = vpack.c.b16 %v532, %v528
    %v565 = vpack.c.b16 %v533, %v529
    %v566 = vpack.c.b16 %v534, %v530
    %v567 = vpack.c.b16 %v535, %v531
    %600 = vmatpush.bf16.msra.mxu0 %v564
    %601 = vmatpush.bf16.msra.mxu0 %v560
    %602 = vmatpush.bf16.msra.mxu0 %v556
    %603 = vmatpush.bf16.msra.mxu0 %v552
    %604 = vmatpush.bf16.msra.mxu0 %v548
    %605 = vmatpush.bf16.msra.mxu0 %v544
    %606 = vmatpush.bf16.msra.mxu0 %v540
    %607 = vmatpush.bf16.msra.mxu0 %v536
    %608 = vmatmul.bf16.gmra.mxu0 %v439
    %v609 = vpop.f32.mrf.mxu0
    %v610 = vadd.f32 0.0, %v609
    %v611 = vpop.f32.mrf.mxu0
    %612 = vdwg.mxu0
    %613 = vmatpush.bf16.msra.mxu0 %v565
    %614 = vmatpush.bf16.msra.mxu0 %v561
    %615 = vmatpush.bf16.msra.mxu0 %v557
    %616 = vmatpush.bf16.msra.mxu0 %v553
    %617 = vmatpush.bf16.msra.mxu0 %v549
    %618 = vmatpush.bf16.msra.mxu0 %v545
    %619 = vmatpush.bf16.msra.mxu0 %v541
    %620 = vmatpush.bf16.msra.mxu0 %v537
    %621 = vmatmul.bf16.gmra.mxu0 %v439
    %v622 = vpop.f32.mrf.mxu0
    %v623 = vadd.f32 0.0, %v622
    %v624 = vpop.f32.mrf.mxu0
    %625 = vdwg.mxu0
    %626 = vmatpush.bf16.msra.mxu0 %v566
    %627 = vmatpush.bf16.msra.mxu0 %v562
    %628 = vmatpush.bf16.msra.mxu0 %v558
    %629 = vmatpush.bf16.msra.mxu0 %v554
    %630 = vmatpush.bf16.msra.mxu0 %v550
    %631 = vmatpush.bf16.msra.mxu0 %v546
    %632 = vmatpush.bf16.msra.mxu0 %v542
    %633 = vmatpush.bf16.msra.mxu0 %v538
    %634 = vmatmul.bf16.gmra.mxu0 %v439
    %v635 = vpop.f32.mrf.mxu0
    %v636 = vadd.f32 0.0, %v635
    %v637 = vpop.f32.mrf.mxu0
    %638 = vdwg.mxu0
    %639 = vmatpush.bf16.msra.mxu0 %v567
    %640 = vmatpush.bf16.msra.mxu0 %v563
    %641 = vmatpush.bf16.msra.mxu0 %v559
    %642 = vmatpush.bf16.msra.mxu0 %v555
    %643 = vmatpush.bf16.msra.mxu0 %v551
    %644 = vmatpush.bf16.msra.mxu0 %v547
    %645 = vmatpush.bf16.msra.mxu0 %v543
    %646 = vmatpush.bf16.msra.mxu0 %v539
    %647 = vmatmul.bf16.gmra.mxu0 %v439
    %v648 = vpop.f32.mrf.mxu0
    %v649 = vadd.f32 0.0, %v648
    %v650 = vpop.f32.mrf.mxu0
    %651 = vdwg.mxu0
    %v652 = vadd.f32 %v435, %v610
    %v653 = vadd.f32 %v436, %v623
    %v654 = vadd.f32 %v437, %v636
    %v655 = vadd.f32 %v438, %v649
    %v656 = vxor.u32 %v652, 2147483648
    %v657 = vxor.u32 %v653, 2147483648
    %v658 = vxor.u32 %v654, 2147483648
    %v659 = vmul.f32 %v656, 1.442695
    %v660 = vpow.pop %v659
    %v661 = vmul.f32 %v657, 1.442695
    %v662 = vpow.pop %v661
    %v663 = vmul.f32 %v658, 1.442695
    %v664 = vpow.pop %v663
    %v665 = vadd.f32 %v660, 1.0
    %v666 = vadd.f32 %v662, 1.0
    %v667 = vadd.f32 %v664, 1.0
    %v668 = vrcp.pop %v665
    %v669 = vmul.f32 %v665, %v668
    %v670 = vsub.f32 1.0, %v669
    %v671 = vmul.f32 %v668, %v670
    %v672 = vadd.f32 %v668, %v671
    %vm673 = vweird.f32 %v665
    %vm674 = vweird.f32 %v668
    %vm675 = vmor %vm673, %vm674
    %v676 = vsel %vm675, %v668, %v672
    %v677 = vand.u32 2147483647, %v665
    %vm678 = vcmp.eq.f32.partialorder %v677, 8.507059e+37
    %v679 = vand.u32 %v665, 2147483648
    %v680 = vor.u32 1.1754944e-38, %v679
    %v681 = vsel %vm678, %v680, %v676
    %v682 = vmul.f32 1.0, %v681
    %v683 = vrcp.pop %v666
    %v684 = vmul.f32 %v666, %v683
    %v685 = vsub.f32 1.0, %v684
    %v686 = vmul.f32 %v683, %v685
    %v687 = vadd.f32 %v683, %v686
    %vm688 = vweird.f32 %v666
    %vm689 = vweird.f32 %v683
    %vm690 = vmor %vm688, %vm689
    %v691 = vsel %vm690, %v683, %v687
    %v692 = vand.u32 2147483647, %v666
    %vm693 = vcmp.eq.f32.partialorder %v692, 8.507059e+37
    %v694 = vand.u32 %v666, 2147483648
    %v695 = vor.u32 1.1754944e-38, %v694
    %v696 = vsel %vm693, %v695, %v691
    %v697 = vmul.f32 1.0, %v696
    %v698 = vrcp.pop %v667
    %v699 = vmul.f32 %v667, %v698
    %v700 = vsub.f32 1.0, %v699
    %v701 = vmul.f32 %v698, %v700
    %v702 = vadd.f32 %v698, %v701
    %vm703 = vweird.f32 %v667
    %vm704 = vweird.f32 %v698
    %vm705 = vmor %vm703, %vm704
    %v706 = vsel %vm705, %v698, %v702
    %v707 = vand.u32 2147483647, %v667
    %vm708 = vcmp.eq.f32.partialorder %v707, 8.507059e+37
    %v709 = vand.u32 %v667, 2147483648
    %v710 = vor.u32 1.1754944e-38, %v709
    %v711 = vsel %vm708, %v710, %v706
    %v712 = vmul.f32 1.0, %v711
    %v713 = vtanh.pop %v655
    %v714 = vmul.f32 %v697, %v434
    %v715 = vmul.f32 %v682, %v713
    %v716 = vadd.f32 %v714, %v715
    %v717 = vtanh.pop %v716
    %v718 = vmul.f32 %v712, %v717
    %719 = vst [vmem:[#allocation5] sm:$0xff] %v718
    %v720 = vld [vmem:[#allocation4 + $0x20] sm:$0xff]
    %v721 = vld [vmem:[#allocation4 + $0x28] sm:$0xff]
    %v722 = vld [vmem:[#allocation4 + $0x30] sm:$0xff]
    %v723 = vld [vmem:[#allocation4 + $0x38] sm:$0xff]
    %v724 = vpack.c.bf16 %v718, %v718
    %725 = vmatpush.bf16.msra.mxu0 %v564
    %726 = vmatpush.bf16.msra.mxu0 %v560
    %727 = vmatpush.bf16.msra.mxu0 %v556
    %728 = vmatpush.bf16.msra.mxu0 %v552
    %729 = vmatpush.bf16.msra.mxu0 %v548
    %730 = vmatpush.bf16.msra.mxu0 %v544
    %731 = vmatpush.bf16.msra.mxu0 %v540
    %732 = vmatpush.bf16.msra.mxu0 %v536
    %733 = vmatmul.bf16.gmra.mxu0 %v724
    %v734 = vpop.f32.mrf.mxu0
    %v735 = vadd.f32 0.0, %v734
    %v736 = vpop.f32.mrf.mxu0
    %737 = vdwg.mxu0
    %738 = vmatpush.bf16.msra.mxu0 %v565
    %739 = vmatpush.bf16.msra.mxu0 %v561
    %740 = vmatpush.bf16.msra.mxu0 %v557
    %741 = vmatpush.bf16.msra.mxu0 %v553
    %742 = vmatpush.bf16.msra.mxu0 %v549
    %743 = vmatpush.bf16.msra.mxu0 %v545
    %744 = vmatpush.bf16.msra.mxu0 %v541
    %745 = vmatpush.bf16.msra.mxu0 %v537
    %746 = vmatmul.bf16.gmra.mxu0 %v724
    %v747 = vpop.f32.mrf.mxu0
    %v748 = vadd.f32 0.0, %v747
    %v749 = vpop.f32.mrf.mxu0
    %750 = vdwg.mxu0
    %751 = vmatpush.bf16.msra.mxu0 %v566
    %752 = vmatpush.bf16.msra.mxu0 %v562
    %753 = vmatpush.bf16.msra.mxu0 %v558
    %754 = vmatpush.bf16.msra.mxu0 %v554
    %755 = vmatpush.bf16.msra.mxu0 %v550
    %756 = vmatpush.bf16.msra.mxu0 %v546
    %757 = vmatpush.bf16.msra.mxu0 %v542
    %758 = vmatpush.bf16.msra.mxu0 %v538
    %759 = vmatmul.bf16.gmra.mxu0 %v724
    %v760 = vpop.f32.mrf.mxu0
    %v761 = vadd.f32 0.0, %v760
    %v762 = vpop.f32.mrf.mxu0
    %763 = vdwg.mxu0
    %764 = vmatpush.bf16.msra.mxu0 %v567
    %765 = vmatpush.bf16.msra.mxu0 %v563
    %766 = vmatpush.bf16.msra.mxu0 %v559
    %767 = vmatpush.bf16.msra.mxu0 %v555
    %768 = vmatpush.bf16.msra.mxu0 %v551
    %769 = vmatpush.bf16.msra.mxu0 %v547
    %770 = vmatpush.bf16.msra.mxu0 %v543
    %771 = vmatpush.bf16.msra.mxu0 %v539
    %772 = vmatmul.bf16.gmra.mxu0 %v724
    %v773 = vpop.f32.mrf.mxu0
    %v774 = vadd.f32 0.0, %v773
    %v775 = vpop.f32.mrf.mxu0
    %776 = vdwg.mxu0
    %v777 = vadd.f32 %v720, %v735
    %v778 = vadd.f32 %v721, %v748
    %v779 = vadd.f32 %v722, %v761
    %v780 = vadd.f32 %v723, %v774
    %v781 = vxor.u32 %v777, 2147483648
    %v782 = vxor.u32 %v778, 2147483648
    %v783 = vxor.u32 %v779, 2147483648
    %v784 = vmul.f32 %v781, 1.442695
    %v785 = vpow.pop %v784
    %v786 = vmul.f32 %v782, 1.442695
    %v787 = vpow.pop %v786
    %v788 = vmul.f32 %v783, 1.442695
    %v789 = vpow.pop %v788
    %v790 = vadd.f32 %v785, 1.0
    %v791 = vadd.f32 %v787, 1.0
    %v792 = vadd.f32 %v789, 1.0
    %v793 = vrcp.pop %v790
    %v794 = vmul.f32 %v790, %v793
    %v795 = vsub.f32 1.0, %v794
    %v796 = vmul.f32 %v793, %v795
    %v797 = vadd.f32 %v793, %v796
    %vm798 = vweird.f32 %v790
    %vm799 = vweird.f32 %v793
    %vm800 = vmor %vm798, %vm799
    %v801 = vsel %vm800, %v793, %v797
    %v802 = vand.u32 2147483647, %v790
    %vm803 = vcmp.eq.f32.partialorder %v802, 8.507059e+37
    %v804 = vand.u32 %v790, 2147483648
    %v805 = vor.u32 1.1754944e-38, %v804
    %v806 = vsel %vm803, %v805, %v801
    %v807 = vmul.f32 1.0, %v806
    %v808 = vrcp.pop %v791
    %v809 = vmul.f32 %v791, %v808
    %v810 = vsub.f32 1.0, %v809
    %v811 = vmul.f32 %v808, %v810
    %v812 = vadd.f32 %v808, %v811
    %vm813 = vweird.f32 %v791
    %vm814 = vweird.f32 %v808
    %vm815 = vmor %vm813, %vm814
    %v816 = vsel %vm815, %v808, %v812
    %v817 = vand.u32 2147483647, %v791
    %vm818 = vcmp.eq.f32.partialorder %v817, 8.507059e+37
    %v819 = vand.u32 %v791, 2147483648
    %v820 = vor.u32 1.1754944e-38, %v819
    %v821 = vsel %vm818, %v820, %v816
    %v822 = vmul.f32 1.0, %v821
    %v823 = vrcp.pop %v792
    %v824 = vmul.f32 %v792, %v823
    %v825 = vsub.f32 1.0, %v824
    %v826 = vmul.f32 %v823, %v825
    %v827 = vadd.f32 %v823, %v826
    %vm828 = vweird.f32 %v792
    %vm829 = vweird.f32 %v823
    %vm830 = vmor %vm828, %vm829
    %v831 = vsel %vm830, %v823, %v827
    %v832 = vand.u32 2147483647, %v792
    %vm833 = vcmp.eq.f32.partialorder %v832, 8.507059e+37
    %v834 = vand.u32 %v792, 2147483648
    %v835 = vor.u32 1.1754944e-38, %v834
    %v836 = vsel %vm833, %v835, %v831
    %v837 = vmul.f32 1.0, %v836
    %v838 = vtanh.pop %v780
    %v839 = vmul.f32 %v822, %v716
    %v840 = vmul.f32 %v807, %v838
    %v841 = vadd.f32 %v839, %v840
    %v842 = vtanh.pop %v841
    %v843 = vmul.f32 %v837, %v842
    %844 = vst [vmem:[#allocation5 + $0x8] sm:$0xff] %v843
    %v845 = vld [vmem:[#allocation4 + $0x40] sm:$0xff]
    %v846 = vld [vmem:[#allocation4 + $0x48] sm:$0xff]
    %v847 = vld [vmem:[#allocation4 + $0x50] sm:$0xff]
    %v848 = vld [vmem:[#allocation4 + $0x58] sm:$0xff]
    %v849 = vpack.c.bf16 %v843, %v843
    %850 = vmatpush.bf16.msra.mxu0 %v564
    %851 = vmatpush.bf16.msra.mxu0 %v560
    %852 = vmatpush.bf16.msra.mxu0 %v556
    %853 = vmatpush.bf16.msra.mxu0 %v552
    %854 = vmatpush.bf16.msra.mxu0 %v548
    %855 = vmatpush.bf16.msra.mxu0 %v544
    %856 = vmatpush.bf16.msra.mxu0 %v540
    %857 = vmatpush.bf16.msra.mxu0 %v536
    %858 = vmatmul.bf16.gmra.mxu0 %v849
    %v859 = vpop.f32.mrf.mxu0
    %v860 = vadd.f32 0.0, %v859
    %v861 = vpop.f32.mrf.mxu0
    %862 = vdwg.mxu0
    %863 = vmatpush.bf16.msra.mxu0 %v565
    %864 = vmatpush.bf16.msra.mxu0 %v561
    %865 = vmatpush.bf16.msra.mxu0 %v557
    %866 = vmatpush.bf16.msra.mxu0 %v553
    %867 = vmatpush.bf16.msra.mxu0 %v549
    %868 = vmatpush.bf16.msra.mxu0 %v545
    %869 = vmatpush.bf16.msra.mxu0 %v541
    %870 = vmatpush.bf16.msra.mxu0 %v537
    %871 = vmatmul.bf16.gmra.mxu0 %v849
    %v872 = vpop.f32.mrf.mxu0
    %v873 = vadd.f32 0.0, %v872
    %v874 = vpop.f32.mrf.mxu0
    %875 = vdwg.mxu0
    %876 = vmatpush.bf16.msra.mxu0 %v566
    %877 = vmatpush.bf16.msra.mxu0 %v562
    %878 = vmatpush.bf16.msra.mxu0 %v558
    %879 = vmatpush.bf16.msra.mxu0 %v554
    %880 = vmatpush.bf16.msra.mxu0 %v550
    %881 = vmatpush.bf16.msra.mxu0 %v546
    %882 = vmatpush.bf16.msra.mxu0 %v542
    %883 = vmatpush.bf16.msra.mxu0 %v538
    %884 = vmatmul.bf16.gmra.mxu0 %v849
    %v885 = vpop.f32.mrf.mxu0
    %v886 = vadd.f32 0.0, %v885
    %v887 = vpop.f32.mrf.mxu0
    %888 = vdwg.mxu0
    %889 = vmatpush.bf16.msra.mxu0 %v567
    %890 = vmatpush.bf16.msra.mxu0 %v563
    %891 = vmatpush.bf16.msra.mxu0 %v559
    %892 = vmatpush.bf16.msra.mxu0 %v555
    %893 = vmatpush.bf16.msra.mxu0 %v551
    %894 = vmatpush.bf16.msra.mxu0 %v547
    %895 = vmatpush.bf16.msra.mxu0 %v543
    %896 = vmatpush.bf16.msra.mxu0 %v539
    %897 = vmatmul.bf16.gmra.mxu0 %v849
    %v898 = vpop.f32.mrf.mxu0
    %v899 = vadd.f32 0.0, %v898
    %v900 = vpop.f32.mrf.mxu0
    %901 = vdwg.mxu0
    %v902 = vadd.f32 %v845, %v860
    %v903 = vadd.f32 %v846, %v873
    %v904 = vadd.f32 %v847, %v886
    %v905 = vadd.f32 %v848, %v899
    %v906 = vxor.u32 %v902, 2147483648
    %v907 = vxor.u32 %v903, 2147483648
    %v908 = vxor.u32 %v904, 2147483648
    %v909 = vmul.f32 %v906, 1.442695
    %v910 = vpow.pop %v909
    %v911 = vmul.f32 %v907, 1.442695
    %v912 = vpow.pop %v911
    %v913 = vmul.f32 %v908, 1.442695
    %v914 = vpow.pop %v913
    %v915 = vadd.f32 %v910, 1.0
    %v916 = vadd.f32 %v912, 1.0
    %v917 = vadd.f32 %v914, 1.0
    %v918 = vrcp.pop %v915
    %v919 = vmul.f32 %v915, %v918
    %v920 = vsub.f32 1.0, %v919
    %v921 = vmul.f32 %v918, %v920
    %v922 = vadd.f32 %v918, %v921
    %vm923 = vweird.f32 %v915
    %vm924 = vweird.f32 %v918
    %vm925 = vmor %vm923, %vm924
    %v926 = vsel %vm925, %v918, %v922
    %v927 = vand.u32 2147483647, %v915
    %vm928 = vcmp.eq.f32.partialorder %v927, 8.507059e+37
    %v929 = vand.u32 %v915, 2147483648
    %v930 = vor.u32 1.1754944e-38, %v929
    %v931 = vsel %vm928, %v930, %v926
    %v932 = vmul.f32 1.0, %v931
    %v933 = vrcp.pop %v916
    %v934 = vmul.f32 %v916, %v933
    %v935 = vsub.f32 1.0, %v934
    %v936 = vmul.f32 %v933, %v935
    %v937 = vadd.f32 %v933, %v936
    %vm938 = vweird.f32 %v916
    %vm939 = vweird.f32 %v933
    %vm940 = vmor %vm938, %vm939
    %v941 = vsel %vm940, %v933, %v937
    %v942 = vand.u32 2147483647, %v916
    %vm943 = vcmp.eq.f32.partialorder %v942, 8.507059e+37
    %v944 = vand.u32 %v916, 2147483648
    %v945 = vor.u32 1.1754944e-38, %v944
    %v946 = vsel %vm943, %v945, %v941
    %v947 = vmul.f32 1.0, %v946
    %v948 = vrcp.pop %v917
    %v949 = vmul.f32 %v917, %v948
    %v950 = vsub.f32 1.0, %v949
    %v951 = vmul.f32 %v948, %v950
    %v952 = vadd.f32 %v948, %v951
    %vm953 = vweird.f32 %v917
    %vm954 = vweird.f32 %v948
    %vm955 = vmor %vm953, %vm954
    %v956 = vsel %vm955, %v948, %v952
    %v957 = vand.u32 2147483647, %v917
    %vm958 = vcmp.eq.f32.partialorder %v957, 8.507059e+37
    %v959 = vand.u32 %v917, 2147483648
    %v960 = vor.u32 1.1754944e-38, %v959
    %v961 = vsel %vm958, %v960, %v956
    %v962 = vmul.f32 1.0, %v961
    %v963 = vtanh.pop %v905
    %v964 = vmul.f32 %v947, %v841
    %v965 = vmul.f32 %v932, %v963
    %v966 = vadd.f32 %v964, %v965
    %v967 = vtanh.pop %v966
    %v968 = vmul.f32 %v962, %v967
    %969 = vst [vmem:[#allocation5 + $0x10] sm:$0xff] %v968
    %v970 = vld [vmem:[#allocation4 + $0x60] sm:$0xff]
    %v971 = vld [vmem:[#allocation4 + $0x68] sm:$0xff]
    %v972 = vld [vmem:[#allocation4 + $0x70] sm:$0xff]
    %v973 = vld [vmem:[#allocation4 + $0x78] sm:$0xff]
    %v974 = vpack.c.bf16 %v968, %v968
    %975 = vmatpush.bf16.msra.mxu0 %v564
    %976 = vmatpush.bf16.msra.mxu0 %v560
    %977 = vmatpush.bf16.msra.mxu0 %v556
    %978 = vmatpush.bf16.msra.mxu0 %v552
    %979 = vmatpush.bf16.msra.mxu0 %v548
    %980 = vmatpush.bf16.msra.mxu0 %v544
    %981 = vmatpush.bf16.msra.mxu0 %v540
    %982 = vmatpush.bf16.msra.mxu0 %v536
    %983 = vmatmul.bf16.gmra.mxu0 %v974
    %v984 = vpop.f32.mrf.mxu0
    %v985 = vadd.f32 0.0, %v984
    %v986 = vpop.f32.mrf.mxu0
    %987 = vdwg.mxu0
    %988 = vmatpush.bf16.msra.mxu0 %v565
    %989 = vmatpush.bf16.msra.mxu0 %v561
    %990 = vmatpush.bf16.msra.mxu0 %v557
    %991 = vmatpush.bf16.msra.mxu0 %v553
    %992 = vmatpush.bf16.msra.mxu0 %v549
    %993 = vmatpush.bf16.msra.mxu0 %v545
    %994 = vmatpush.bf16.msra.mxu0 %v541
    %995 = vmatpush.bf16.msra.mxu0 %v537
    %996 = vmatmul.bf16.gmra.mxu0 %v974
    %v997 = vpop.f32.mrf.mxu0
    %v998 = vadd.f32 0.0, %v997
    %v999 = vpop.f32.mrf.mxu0
    %1000 = vdwg.mxu0
    %1001 = vmatpush.bf16.msra.mxu0 %v566
    %1002 = vmatpush.bf16.msra.mxu0 %v562
    %1003 = vmatpush.bf16.msra.mxu0 %v558
    %1004 = vmatpush.bf16.msra.mxu0 %v554
    %1005 = vmatpush.bf16.msra.mxu0 %v550
    %1006 = vmatpush.bf16.msra.mxu0 %v546
    %1007 = vmatpush.bf16.msra.mxu0 %v542
    %1008 = vmatpush.bf16.msra.mxu0 %v538
    %1009 = vmatmul.bf16.gmra.mxu0 %v974
    %v1010 = vpop.f32.mrf.mxu0
    %v1011 = vadd.f32 0.0, %v1010
    %v1012 = vpop.f32.mrf.mxu0
    %1013 = vdwg.mxu0
    %1014 = vmatpush.bf16.msra.mxu0 %v567
    %1015 = vmatpush.bf16.msra.mxu0 %v563
    %1016 = vmatpush.bf16.msra.mxu0 %v559
    %1017 = vmatpush.bf16.msra.mxu0 %v555
    %1018 = vmatpush.bf16.msra.mxu0 %v551
    %1019 = vmatpush.bf16.msra.mxu0 %v547
    %1020 = vmatpush.bf16.msra.mxu0 %v543
    %1021 = vmatpush.bf16.msra.mxu0 %v539
    %1022 = vmatmul.bf16.gmra.mxu0 %v974
    %v1023 = vpop.f32.mrf.mxu0
    %v1024 = vadd.f32 0.0, %v1023
    %v1025 = vpop.f32.mrf.mxu0
    %1026 = vdwg.mxu0
    %v1027 = vadd.f32 %v970, %v985
    %v1028 = vadd.f32 %v971, %v998
    %v1029 = vadd.f32 %v972, %v1011
    %v1030 = vadd.f32 %v973, %v1024
    %v1031 = vxor.u32 %v1027, 2147483648
    %v1032 = vxor.u32 %v1028, 2147483648
    %v1033 = vxor.u32 %v1029, 2147483648
    %v1034 = vmul.f32 %v1031, 1.442695
    %v1035 = vpow.pop %v1034
    %v1036 = vmul.f32 %v1032, 1.442695
    %v1037 = vpow.pop %v1036
    %v1038 = vmul.f32 %v1033, 1.442695
    %v1039 = vpow.pop %v1038
    %v1040 = vadd.f32 %v1035, 1.0
    %v1041 = vadd.f32 %v1037, 1.0
    %v1042 = vadd.f32 %v1039, 1.0
    %v1043 = vrcp.pop %v1040
    %v1044 = vmul.f32 %v1040, %v1043
    %v1045 = vsub.f32 1.0, %v1044
    %v1046 = vmul.f32 %v1043, %v1045
    %v1047 = vadd.f32 %v1043, %v1046
    %vm1048 = vweird.f32 %v1040
    %vm1049 = vweird.f32 %v1043
    %vm1050 = vmor %vm1048, %vm1049
    %v1051 = vsel %vm1050, %v1043, %v1047
    %v1052 = vand.u32 2147483647, %v1040
    %vm1053 = vcmp.eq.f32.partialorder %v1052, 8.507059e+37
    %v1054 = vand.u32 %v1040, 2147483648
    %v1055 = vor.u32 1.1754944e-38, %v1054
    %v1056 = vsel %vm1053, %v1055, %v1051
    %v1057 = vmul.f32 1.0, %v1056
    %v1058 = vrcp.pop %v1041
    %v1059 = vmul.f32 %v1041, %v1058
    %v1060 = vsub.f32 1.0, %v1059
    %v1061 = vmul.f32 %v1058, %v1060
    %v1062 = vadd.f32 %v1058, %v1061
    %vm1063 = vweird.f32 %v1041
    %vm1064 = vweird.f32 %v1058
    %vm1065 = vmor %vm1063, %vm1064
    %v1066 = vsel %vm1065, %v1058, %v1062
    %v1067 = vand.u32 2147483647, %v1041
    %vm1068 = vcmp.eq.f32.partialorder %v1067, 8.507059e+37
    %v1069 = vand.u32 %v1041, 2147483648
    %v1070 = vor.u32 1.1754944e-38, %v1069
    %v1071 = vsel %vm1068, %v1070, %v1066
    %v1072 = vmul.f32 1.0, %v1071
    %v1073 = vrcp.pop %v1042
    %v1074 = vmul.f32 %v1042, %v1073
    %v1075 = vsub.f32 1.0, %v1074
    %v1076 = vmul.f32 %v1073, %v1075
    %v1077 = vadd.f32 %v1073, %v1076
    %vm1078 = vweird.f32 %v1042
    %vm1079 = vweird.f32 %v1073
    %vm1080 = vmor %vm1078, %vm1079
    %v1081 = vsel %vm1080, %v1073, %v1077
    %v1082 = vand.u32 2147483647, %v1042
    %vm1083 = vcmp.eq.f32.partialorder %v1082, 8.507059e+37
    %v1084 = vand.u32 %v1042, 2147483648
    %v1085 = vor.u32 1.1754944e-38, %v1084
    %v1086 = vsel %vm1083, %v1085, %v1081
    %v1087 = vmul.f32 1.0, %v1086
    %v1088 = vtanh.pop %v1030
    %v1089 = vmul.f32 %v1072, %v966
    %v1090 = vmul.f32 %v1057, %v1088
    %v1091 = vadd.f32 %v1089, %v1090
    %v1092 = vtanh.pop %v1091
    %v1093 = vmul.f32 %v1087, %v1092
    %1094 = vst [vmem:[#allocation5 + $0x18] sm:$0xff] %v1093
    %v1095 = vld [vmem:[#allocation4 + $0x80] sm:$0xff]
    %v1096 = vld [vmem:[#allocation4 + $0x88] sm:$0xff]
    %v1097 = vld [vmem:[#allocation4 + $0x90] sm:$0xff]
    %v1098 = vld [vmem:[#allocation4 + $0x98] sm:$0xff]
    %v1099 = vpack.c.bf16 %v1093, %v1093
    %1100 = vmatpush.bf16.msra.mxu0 %v564
    %1101 = vmatpush.bf16.msra.mxu0 %v560
    %1102 = vmatpush.bf16.msra.mxu0 %v556
    %1103 = vmatpush.bf16.msra.mxu0 %v552
    %1104 = vmatpush.bf16.msra.mxu0 %v548
    %1105 = vmatpush.bf16.msra.mxu0 %v544
    %1106 = vmatpush.bf16.msra.mxu0 %v540
    %1107 = vmatpush.bf16.msra.mxu0 %v536
    %1108 = vmatmul.bf16.gmra.mxu0 %v1099
    %v1109 = vpop.f32.mrf.mxu0
    %v1110 = vadd.f32 0.0, %v1109
    %v1111 = vpop.f32.mrf.mxu0
    %1112 = vdwg.mxu0
    %1113 = vmatpush.bf16.msra.mxu0 %v565
    %1114 = vmatpush.bf16.msra.mxu0 %v561
    %1115 = vmatpush.bf16.msra.mxu0 %v557
    %1116 = vmatpush.bf16.msra.mxu0 %v553
    %1117 = vmatpush.bf16.msra.mxu0 %v549
    %1118 = vmatpush.bf16.msra.mxu0 %v545
    %1119 = vmatpush.bf16.msra.mxu0 %v541
    %1120 = vmatpush.bf16.msra.mxu0 %v537
    %1121 = vmatmul.bf16.gmra.mxu0 %v1099
    %v1122 = vpop.f32.mrf.mxu0
    %v1123 = vadd.f32 0.0, %v1122
    %v1124 = vpop.f32.mrf.mxu0
    %1125 = vdwg.mxu0
    %1126 = vmatpush.bf16.msra.mxu0 %v566
    %1127 = vmatpush.bf16.msra.mxu0 %v562
    %1128 = vmatpush.bf16.msra.mxu0 %v558
    %1129 = vmatpush.bf16.msra.mxu0 %v554
    %1130 = vmatpush.bf16.msra.mxu0 %v550
    %1131 = vmatpush.bf16.msra.mxu0 %v546
    %1132 = vmatpush.bf16.msra.mxu0 %v542
    %1133 = vmatpush.bf16.msra.mxu0 %v538
    %1134 = vmatmul.bf16.gmra.mxu0 %v1099
    %v1135 = vpop.f32.mrf.mxu0
    %v1136 = vadd.f32 0.0, %v1135
    %v1137 = vpop.f32.mrf.mxu0
    %1138 = vdwg.mxu0
    %1139 = vmatpush.bf16.msra.mxu0 %v567
    %1140 = vmatpush.bf16.msra.mxu0 %v563
    %1141 = vmatpush.bf16.msra.mxu0 %v559
    %1142 = vmatpush.bf16.msra.mxu0 %v555
    %1143 = vmatpush.bf16.msra.mxu0 %v551
    %1144 = vmatpush.bf16.msra.mxu0 %v547
    %1145 = vmatpush.bf16.msra.mxu0 %v543
    %1146 = vmatpush.bf16.msra.mxu0 %v539
    %1147 = vmatmul.bf16.gmra.mxu0 %v1099
    %v1148 = vpop.f32.mrf.mxu0
    %v1149 = vadd.f32 0.0, %v1148
    %v1150 = vpop.f32.mrf.mxu0
    %1151 = vdwg.mxu0
    %v1152 = vadd.f32 %v1095, %v1110
    %v1153 = vadd.f32 %v1096, %v1123
    %v1154 = vadd.f32 %v1097, %v1136
    %v1155 = vadd.f32 %v1098, %v1149
    %v1156 = vxor.u32 %v1152, 2147483648
    %v1157 = vxor.u32 %v1153, 2147483648
    %v1158 = vxor.u32 %v1154, 2147483648
    %v1159 = vmul.f32 %v1156, 1.442695
    %v1160 = vpow.pop %v1159
    %v1161 = vmul.f32 %v1157, 1.442695
    %v1162 = vpow.pop %v1161
    %v1163 = vmul.f32 %v1158, 1.442695
    %v1164 = vpow.pop %v1163
    %v1165 = vadd.f32 %v1160, 1.0
    %v1166 = vadd.f32 %v1162, 1.0
    %v1167 = vadd.f32 %v1164, 1.0
    %v1168 = vrcp.pop %v1165
    %v1169 = vmul.f32 %v1165, %v1168
    %v1170 = vsub.f32 1.0, %v1169
    %v1171 = vmul.f32 %v1168, %v1170
    %v1172 = vadd.f32 %v1168, %v1171
    %vm1173 = vweird.f32 %v1165
    %vm1174 = vweird.f32 %v1168
    %vm1175 = vmor %vm1173, %vm1174
    %v1176 = vsel %vm1175, %v1168, %v1172
    %v1177 = vand.u32 2147483647, %v1165
    %vm1178 = vcmp.eq.f32.partialorder %v1177, 8.507059e+37
    %v1179 = vand.u32 %v1165, 2147483648
    %v1180 = vor.u32 1.1754944e-38, %v1179
    %v1181 = vsel %vm1178, %v1180, %v1176
    %v1182 = vmul.f32 1.0, %v1181
    %v1183 = vrcp.pop %v1166
    %v1184 = vmul.f32 %v1166, %v1183
    %v1185 = vsub.f32 1.0, %v1184
    %v1186 = vmul.f32 %v1183, %v1185
    %v1187 = vadd.f32 %v1183, %v1186
    %vm1188 = vweird.f32 %v1166
    %vm1189 = vweird.f32 %v1183
    %vm1190 = vmor %vm1188, %vm1189
    %v1191 = vsel %vm1190, %v1183, %v1187
    %v1192 = vand.u32 2147483647, %v1166
    %vm1193 = vcmp.eq.f32.partialorder %v1192, 8.507059e+37
    %v1194 = vand.u32 %v1166, 2147483648
    %v1195 = vor.u32 1.1754944e-38, %v1194
    %v1196 = vsel %vm1193, %v1195, %v1191
    %v1197 = vmul.f32 1.0, %v1196
    %v1198 = vrcp.pop %v1167
    %v1199 = vmul.f32 %v1167, %v1198
    %v1200 = vsub.f32 1.0, %v1199
    %v1201 = vmul.f32 %v1198, %v1200
    %v1202 = vadd.f32 %v1198, %v1201
    %vm1203 = vweird.f32 %v1167
    %vm1204 = vweird.f32 %v1198
    %vm1205 = vmor %vm1203, %vm1204
    %v1206 = vsel %vm1205, %v1198, %v1202
    %v1207 = vand.u32 2147483647, %v1167
    %vm1208 = vcmp.eq.f32.partialorder %v1207, 8.507059e+37
    %v1209 = vand.u32 %v1167, 2147483648
    %v1210 = vor.u32 1.1754944e-38, %v1209
    %v1211 = vsel %vm1208, %v1210, %v1206
    %v1212 = vmul.f32 1.0, %v1211
    %v1213 = vtanh.pop %v1155
    %v1214 = vmul.f32 %v1197, %v1091
    %v1215 = vmul.f32 %v1182, %v1213
    %v1216 = vadd.f32 %v1214, %v1215
    %v1217 = vtanh.pop %v1216
    %v1218 = vmul.f32 %v1212, %v1217
    %1219 = vst [vmem:[#allocation5 + $0x20] sm:$0xff] %v1218
    %v1220 = vld [vmem:[#allocation4 + $0xa0] sm:$0xff]
    %v1221 = vld [vmem:[#allocation4 + $0xa8] sm:$0xff]
    %v1222 = vld [vmem:[#allocation4 + $0xb0] sm:$0xff]
    %v1223 = vld [vmem:[#allocation4 + $0xb8] sm:$0xff]
    %v1224 = vpack.c.bf16 %v1218, %v1218
    %1225 = vmatpush.bf16.msra.mxu0 %v564
    %1226 = vmatpush.bf16.msra.mxu0 %v560
    %1227 = vmatpush.bf16.msra.mxu0 %v556
    %1228 = vmatpush.bf16.msra.mxu0 %v552
    %1229 = vmatpush.bf16.msra.mxu0 %v548
    %1230 = vmatpush.bf16.msra.mxu0 %v544
    %1231 = vmatpush.bf16.msra.mxu0 %v540
    %1232 = vmatpush.bf16.msra.mxu0 %v536
    %1233 = vmatmul.bf16.gmra.mxu0 %v1224
    %v1234 = vpop.f32.mrf.mxu0
    %v1235 = vadd.f32 0.0, %v1234
    %v1236 = vpop.f32.mrf.mxu0
    %1237 = vdwg.mxu0
    %1238 = vmatpush.bf16.msra.mxu0 %v565
    %1239 = vmatpush.bf16.msra.mxu0 %v561
    %1240 = vmatpush.bf16.msra.mxu0 %v557
    %1241 = vmatpush.bf16.msra.mxu0 %v553
    %1242 = vmatpush.bf16.msra.mxu0 %v549
    %1243 = vmatpush.bf16.msra.mxu0 %v545
    %1244 = vmatpush.bf16.msra.mxu0 %v541
    %1245 = vmatpush.bf16.msra.mxu0 %v537
    %1246 = vmatmul.bf16.gmra.mxu0 %v1224
    %v1247 = vpop.f32.mrf.mxu0
    %v1248 = vadd.f32 0.0, %v1247
    %v1249 = vpop.f32.mrf.mxu0
    %1250 = vdwg.mxu0
    %1251 = vmatpush.bf16.msra.mxu0 %v566
    %1252 = vmatpush.bf16.msra.mxu0 %v562
    %1253 = vmatpush.bf16.msra.mxu0 %v558
    %1254 = vmatpush.bf16.msra.mxu0 %v554
    %1255 = vmatpush.bf16.msra.mxu0 %v550
    %1256 = vmatpush.bf16.msra.mxu0 %v546
    %1257 = vmatpush.bf16.msra.mxu0 %v542
    %1258 = vmatpush.bf16.msra.mxu0 %v538
    %1259 = vmatmul.bf16.gmra.mxu0 %v1224
    %v1260 = vpop.f32.mrf.mxu0
    %v1261 = vadd.f32 0.0, %v1260
    %v1262 = vpop.f32.mrf.mxu0
    %1263 = vdwg.mxu0
    %1264 = vmatpush.bf16.msra.mxu0 %v567
    %1265 = vmatpush.bf16.msra.mxu0 %v563
    %1266 = vmatpush.bf16.msra.mxu0 %v559
    %1267 = vmatpush.bf16.msra.mxu0 %v555
    %1268 = vmatpush.bf16.msra.mxu0 %v551
    %1269 = vmatpush.bf16.msra.mxu0 %v547
    %1270 = vmatpush.bf16.msra.mxu0 %v543
    %1271 = vmatpush.bf16.msra.mxu0 %v539
    %1272 = vmatmul.bf16.gmra.mxu0 %v1224
    %v1273 = vpop.f32.mrf.mxu0
    %v1274 = vadd.f32 0.0, %v1273
    %v1275 = vpop.f32.mrf.mxu0
    %1276 = vdwg.mxu0
    %v1277 = vadd.f32 %v1220, %v1235
    %v1278 = vadd.f32 %v1221, %v1248
    %v1279 = vadd.f32 %v1222, %v1261
    %v1280 = vadd.f32 %v1223, %v1274
    %v1281 = vxor.u32 %v1277, 2147483648
    %v1282 = vxor.u32 %v1278, 2147483648
    %v1283 = vxor.u32 %v1279, 2147483648
    %v1284 = vmul.f32 %v1281, 1.442695
    %v1285 = vpow.pop %v1284
    %v1286 = vmul.f32 %v1282, 1.442695
    %v1287 = vpow.pop %v1286
    %v1288 = vmul.f32 %v1283, 1.442695
    %v1289 = vpow.pop %v1288
    %v1290 = vadd.f32 %v1285, 1.0
    %v1291 = vadd.f32 %v1287, 1.0
    %v1292 = vadd.f32 %v1289, 1.0
    %v1293 = vrcp.pop %v1290
    %v1294 = vmul.f32 %v1290, %v1293
    %v1295 = vsub.f32 1.0, %v1294
    %v1296 = vmul.f32 %v1293, %v1295
    %v1297 = vadd.f32 %v1293, %v1296
    %vm1298 = vweird.f32 %v1290
    %vm1299 = vweird.f32 %v1293
    %vm1300 = vmor %vm1298, %vm1299
    %v1301 = vsel %vm1300, %v1293, %v1297
    %v1302 = vand.u32 2147483647, %v1290
    %vm1303 = vcmp.eq.f32.partialorder %v1302, 8.507059e+37
    %v1304 = vand.u32 %v1290, 2147483648
    %v1305 = vor.u32 1.1754944e-38, %v1304
    %v1306 = vsel %vm1303, %v1305, %v1301
    %v1307 = vmul.f32 1.0, %v1306
    %v1308 = vrcp.pop %v1291
    %v1309 = vmul.f32 %v1291, %v1308
    %v1310 = vsub.f32 1.0, %v1309
    %v1311 = vmul.f32 %v1308, %v1310
    %v1312 = vadd.f32 %v1308, %v1311
    %vm1313 = vweird.f32 %v1291
    %vm1314 = vweird.f32 %v1308
    %vm1315 = vmor %vm1313, %vm1314
    %v1316 = vsel %vm1315, %v1308, %v1312
    %v1317 = vand.u32 2147483647, %v1291
    %vm1318 = vcmp.eq.f32.partialorder %v1317, 8.507059e+37
    %v1319 = vand.u32 %v1291, 2147483648
    %v1320 = vor.u32 1.1754944e-38, %v1319
    %v1321 = vsel %vm1318, %v1320, %v1316
    %v1322 = vmul.f32 1.0, %v1321
    %v1323 = vrcp.pop %v1292
    %v1324 = vmul.f32 %v1292, %v1323
    %v1325 = vsub.f32 1.0, %v1324
    %v1326 = vmul.f32 %v1323, %v1325
    %v1327 = vadd.f32 %v1323, %v1326
    %vm1328 = vweird.f32 %v1292
    %vm1329 = vweird.f32 %v1323
    %vm1330 = vmor %vm1328, %vm1329
    %v1331 = vsel %vm1330, %v1323, %v1327
    %v1332 = vand.u32 2147483647, %v1292
    %vm1333 = vcmp.eq.f32.partialorder %v1332, 8.507059e+37
    %v1334 = vand.u32 %v1292, 2147483648
    %v1335 = vor.u32 1.1754944e-38, %v1334
    %v1336 = vsel %vm1333, %v1335, %v1331
    %v1337 = vmul.f32 1.0, %v1336
    %v1338 = vtanh.pop %v1280
    %v1339 = vmul.f32 %v1322, %v1216
    %v1340 = vmul.f32 %v1307, %v1338
    %v1341 = vadd.f32 %v1339, %v1340
    %v1342 = vtanh.pop %v1341
    %v1343 = vmul.f32 %v1337, %v1342
    %1344 = vst [vmem:[#allocation5 + $0x28] sm:$0xff] %v1343
    %v1345 = vld [vmem:[#allocation4 + $0xc0] sm:$0xff]
    %v1346 = vld [vmem:[#allocation4 + $0xc8] sm:$0xff]
    %v1347 = vld [vmem:[#allocation4 + $0xd0] sm:$0xff]
    %v1348 = vld [vmem:[#allocation4 + $0xd8] sm:$0xff]
    %v1349 = vpack.c.bf16 %v1343, %v1343
    %1350 = vmatpush.bf16.msra.mxu0 %v564
    %1351 = vmatpush.bf16.msra.mxu0 %v560
    %1352 = vmatpush.bf16.msra.mxu0 %v556
    %1353 = vmatpush.bf16.msra.mxu0 %v552
    %1354 = vmatpush.bf16.msra.mxu0 %v548
    %1355 = vmatpush.bf16.msra.mxu0 %v544
    %1356 = vmatpush.bf16.msra.mxu0 %v540
    %1357 = vmatpush.bf16.msra.mxu0 %v536
    %1358 = vmatmul.bf16.gmra.mxu0 %v1349
    %v1359 = vpop.f32.mrf.mxu0
    %v1360 = vadd.f32 0.0, %v1359
    %v1361 = vpop.f32.mrf.mxu0
    %1362 = vdwg.mxu0
    %1363 = vmatpush.bf16.msra.mxu0 %v565
    %1364 = vmatpush.bf16.msra.mxu0 %v561
    %1365 = vmatpush.bf16.msra.mxu0 %v557
    %1366 = vmatpush.bf16.msra.mxu0 %v553
    %1367 = vmatpush.bf16.msra.mxu0 %v549
    %1368 = vmatpush.bf16.msra.mxu0 %v545
    %1369 = vmatpush.bf16.msra.mxu0 %v541
    %1370 = vmatpush.bf16.msra.mxu0 %v537
    %1371 = vmatmul.bf16.gmra.mxu0 %v1349
    %v1372 = vpop.f32.mrf.mxu0
    %v1373 = vadd.f32 0.0, %v1372
    %v1374 = vpop.f32.mrf.mxu0
    %1375 = vdwg.mxu0
    %1376 = vmatpush.bf16.msra.mxu0 %v566
    %1377 = vmatpush.bf16.msra.mxu0 %v562
    %1378 = vmatpush.bf16.msra.mxu0 %v558
    %1379 = vmatpush.bf16.msra.mxu0 %v554
    %1380 = vmatpush.bf16.msra.mxu0 %v550
    %1381 = vmatpush.bf16.msra.mxu0 %v546
    %1382 = vmatpush.bf16.msra.mxu0 %v542
    %1383 = vmatpush.bf16.msra.mxu0 %v538
    %1384 = vmatmul.bf16.gmra.mxu0 %v1349
    %v1385 = vpop.f32.mrf.mxu0
    %v1386 = vadd.f32 0.0, %v1385
    %v1387 = vpop.f32.mrf.mxu0
    %1388 = vdwg.mxu0
    %1389 = vmatpush.bf16.msra.mxu0 %v567
    %1390 = vmatpush.bf16.msra.mxu0 %v563
    %1391 = vmatpush.bf16.msra.mxu0 %v559
    %1392 = vmatpush.bf16.msra.mxu0 %v555
    %1393 = vmatpush.bf16.msra.mxu0 %v551
    %1394 = vmatpush.bf16.msra.mxu0 %v547
    %1395 = vmatpush.bf16.msra.mxu0 %v543
    %1396 = vmatpush.bf16.msra.mxu0 %v539
    %1397 = vmatmul.bf16.gmra.mxu0 %v1349
    %v1398 = vpop.f32.mrf.mxu0
    %v1399 = vadd.f32 0.0, %v1398
    %v1400 = vpop.f32.mrf.mxu0
    %1401 = vdwg.mxu0
    %v1402 = vadd.f32 %v1345, %v1360
    %v1403 = vadd.f32 %v1346, %v1373
    %v1404 = vadd.f32 %v1347, %v1386
    %v1405 = vadd.f32 %v1348, %v1399
    %v1406 = vxor.u32 %v1402, 2147483648
    %v1407 = vxor.u32 %v1403, 2147483648
    %v1408 = vxor.u32 %v1404, 2147483648
    %v1409 = vmul.f32 %v1406, 1.442695
    %v1410 = vpow.pop %v1409
    %v1411 = vmul.f32 %v1407, 1.442695
    %v1412 = vpow.pop %v1411
    %v1413 = vmul.f32 %v1408, 1.442695
    %v1414 = vpow.pop %v1413
    %v1415 = vadd.f32 %v1410, 1.0
    %v1416 = vadd.f32 %v1412, 1.0
    %v1417 = vadd.f32 %v1414, 1.0
    %v1418 = vrcp.pop %v1415
    %v1419 = vmul.f32 %v1415, %v1418
    %v1420 = vsub.f32 1.0, %v1419
    %v1421 = vmul.f32 %v1418, %v1420
    %v1422 = vadd.f32 %v1418, %v1421
    %vm1423 = vweird.f32 %v1415
    %vm1424 = vweird.f32 %v1418
    %vm1425 = vmor %vm1423, %vm1424
    %v1426 = vsel %vm1425, %v1418, %v1422
    %v1427 = vand.u32 2147483647, %v1415
    %vm1428 = vcmp.eq.f32.partialorder %v1427, 8.507059e+37
    %v1429 = vand.u32 %v1415, 2147483648
    %v1430 = vor.u32 1.1754944e-38, %v1429
    %v1431 = vsel %vm1428, %v1430, %v1426
    %v1432 = vmul.f32 1.0, %v1431
    %v1433 = vrcp.pop %v1416
    %v1434 = vmul.f32 %v1416, %v1433
    %v1435 = vsub.f32 1.0, %v1434
    %v1436 = vmul.f32 %v1433, %v1435
    %v1437 = vadd.f32 %v1433, %v1436
    %vm1438 = vweird.f32 %v1416
    %vm1439 = vweird.f32 %v1433
    %vm1440 = vmor %vm1438, %vm1439
    %v1441 = vsel %vm1440, %v1433, %v1437
    %v1442 = vand.u32 2147483647, %v1416
    %vm1443 = vcmp.eq.f32.partialorder %v1442, 8.507059e+37
    %v1444 = vand.u32 %v1416, 2147483648
    %v1445 = vor.u32 1.1754944e-38, %v1444
    %v1446 = vsel %vm1443, %v1445, %v1441
    %v1447 = vmul.f32 1.0, %v1446
    %v1448 = vrcp.pop %v1417
    %v1449 = vmul.f32 %v1417, %v1448
    %v1450 = vsub.f32 1.0, %v1449
    %v1451 = vmul.f32 %v1448, %v1450
    %v1452 = vadd.f32 %v1448, %v1451
    %vm1453 = vweird.f32 %v1417
    %vm1454 = vweird.f32 %v1448
    %vm1455 = vmor %vm1453, %vm1454
    %v1456 = vsel %vm1455, %v1448, %v1452
    %v1457 = vand.u32 2147483647, %v1417
    %vm1458 = vcmp.eq.f32.partialorder %v1457, 8.507059e+37
    %v1459 = vand.u32 %v1417, 2147483648
    %v1460 = vor.u32 1.1754944e-38, %v1459
    %v1461 = vsel %vm1458, %v1460, %v1456
    %v1462 = vmul.f32 1.0, %v1461
    %v1463 = vtanh.pop %v1405
    %v1464 = vmul.f32 %v1447, %v1341
    %v1465 = vmul.f32 %v1432, %v1463
    %v1466 = vadd.f32 %v1464, %v1465
    %v1467 = vtanh.pop %v1466
    %v1468 = vmul.f32 %v1462, %v1467
    %1469 = vst [vmem:[#allocation5 + $0x30] sm:$0xff] %v1468
    %v1470 = vld [vmem:[#allocation4 + $0xe0] sm:$0xff]
    %v1471 = vld [vmem:[#allocation4 + $0xe8] sm:$0xff]
    %v1472 = vld [vmem:[#allocation4 + $0xf0] sm:$0xff]
    %v1473 = vld [vmem:[#allocation4 + $0xf8] sm:$0xff]
    %v1474 = vpack.c.bf16 %v1468, %v1468
    %1475 = vmatpush.bf16.msra.mxu0 %v564
    %1476 = vmatpush.bf16.msra.mxu0 %v560
    %1477 = vmatpush.bf16.msra.mxu0 %v556
    %1478 = vmatpush.bf16.msra.mxu0 %v552
    %1479 = vmatpush.bf16.msra.mxu0 %v548
    %1480 = vmatpush.bf16.msra.mxu0 %v544
    %1481 = vmatpush.bf16.msra.mxu0 %v540
    %1482 = vmatpush.bf16.msra.mxu0 %v536
    %1483 = vmatmul.bf16.gmra.mxu0 %v1474
    %v1484 = vpop.f32.mrf.mxu0
    %v1485 = vadd.f32 0.0, %v1484
    %v1486 = vpop.f32.mrf.mxu0
    %1487 = vdwg.mxu0
    %1488 = vmatpush.bf16.msra.mxu0 %v565
    %1489 = vmatpush.bf16.msra.mxu0 %v561
    %1490 = vmatpush.bf16.msra.mxu0 %v557
    %1491 = vmatpush.bf16.msra.mxu0 %v553
    %1492 = vmatpush.bf16.msra.mxu0 %v549
    %1493 = vmatpush.bf16.msra.mxu0 %v545
    %1494 = vmatpush.bf16.msra.mxu0 %v541
    %1495 = vmatpush.bf16.msra.mxu0 %v537
    %1496 = vmatmul.bf16.gmra.mxu0 %v1474
    %v1497 = vpop.f32.mrf.mxu0
    %v1498 = vadd.f32 0.0, %v1497
    %v1499 = vpop.f32.mrf.mxu0
    %1500 = vdwg.mxu0
    %1501 = vmatpush.bf16.msra.mxu0 %v566
    %1502 = vmatpush.bf16.msra.mxu0 %v562
    %1503 = vmatpush.bf16.msra.mxu0 %v558
    %1504 = vmatpush.bf16.msra.mxu0 %v554
    %1505 = vmatpush.bf16.msra.mxu0 %v550
    %1506 = vmatpush.bf16.msra.mxu0 %v546
    %1507 = vmatpush.bf16.msra.mxu0 %v542
    %1508 = vmatpush.bf16.msra.mxu0 %v538
    %1509 = vmatmul.bf16.gmra.mxu0 %v1474
    %v1510 = vpop.f32.mrf.mxu0
    %v1511 = vadd.f32 0.0, %v1510
    %v1512 = vpop.f32.mrf.mxu0
    %1513 = vdwg.mxu0
    %1514 = vmatpush.bf16.msra.mxu0 %v567
    %1515 = vmatpush.bf16.msra.mxu0 %v563
    %1516 = vmatpush.bf16.msra.mxu0 %v559
    %1517 = vmatpush.bf16.msra.mxu0 %v555
    %1518 = vmatpush.bf16.msra.mxu0 %v551
    %1519 = vmatpush.bf16.msra.mxu0 %v547
    %1520 = vmatpush.bf16.msra.mxu0 %v543
    %1521 = vmatpush.bf16.msra.mxu0 %v539
    %1522 = vmatmul.bf16.gmra.mxu0 %v1474
    %v1523 = vpop.f32.mrf.mxu0
    %v1524 = vadd.f32 0.0, %v1523
    %v1525 = vpop.f32.mrf.mxu0
    %1526 = vdwg.mxu0
    %v1527 = vadd.f32 %v1470, %v1485
    %v1528 = vadd.f32 %v1471, %v1498
    %v1529 = vadd.f32 %v1472, %v1511
    %v1530 = vadd.f32 %v1473, %v1524
    %v1531 = vxor.u32 %v1527, 2147483648
    %v1532 = vxor.u32 %v1528, 2147483648
    %v1533 = vxor.u32 %v1529, 2147483648
    %v1534 = vmul.f32 %v1531, 1.442695
    %v1535 = vpow.pop %v1534
    %v1536 = vmul.f32 %v1532, 1.442695
    %v1537 = vpow.pop %v1536
    %v1538 = vmul.f32 %v1533, 1.442695
    %v1539 = vpow.pop %v1538
    %v1540 = vadd.f32 %v1535, 1.0
    %v1541 = vadd.f32 %v1537, 1.0
    %v1542 = vadd.f32 %v1539, 1.0
    %v1543 = vrcp.pop %v1540
    %v1544 = vmul.f32 %v1540, %v1543
    %v1545 = vsub.f32 1.0, %v1544
    %v1546 = vmul.f32 %v1543, %v1545
    %v1547 = vadd.f32 %v1543, %v1546
    %vm1548 = vweird.f32 %v1540
    %vm1549 = vweird.f32 %v1543
    %vm1550 = vmor %vm1548, %vm1549
    %v1551 = vsel %vm1550, %v1543, %v1547
    %v1552 = vand.u32 2147483647, %v1540
    %vm1553 = vcmp.eq.f32.partialorder %v1552, 8.507059e+37
    %v1554 = vand.u32 %v1540, 2147483648
    %v1555 = vor.u32 1.1754944e-38, %v1554
    %v1556 = vsel %vm1553, %v1555, %v1551
    %v1557 = vmul.f32 1.0, %v1556
    %v1558 = vrcp.pop %v1541
    %v1559 = vmul.f32 %v1541, %v1558
    %v1560 = vsub.f32 1.0, %v1559
    %v1561 = vmul.f32 %v1558, %v1560
    %v1562 = vadd.f32 %v1558, %v1561
    %vm1563 = vweird.f32 %v1541
    %vm1564 = vweird.f32 %v1558
    %vm1565 = vmor %vm1563, %vm1564
    %v1566 = vsel %vm1565, %v1558, %v1562
    %v1567 = vand.u32 2147483647, %v1541
    %vm1568 = vcmp.eq.f32.partialorder %v1567, 8.507059e+37
    %v1569 = vand.u32 %v1541, 2147483648
    %v1570 = vor.u32 1.1754944e-38, %v1569
    %v1571 = vsel %vm1568, %v1570, %v1566
    %v1572 = vmul.f32 1.0, %v1571
    %v1573 = vrcp.pop %v1542
    %v1574 = vmul.f32 %v1542, %v1573
    %v1575 = vsub.f32 1.0, %v1574
    %v1576 = vmul.f32 %v1573, %v1575
    %v1577 = vadd.f32 %v1573, %v1576
    %vm1578 = vweird.f32 %v1542
    %vm1579 = vweird.f32 %v1573
    %vm1580 = vmor %vm1578, %vm1579
    %v1581 = vsel %vm1580, %v1573, %v1577
    %v1582 = vand.u32 2147483647, %v1542
    %vm1583 = vcmp.eq.f32.partialorder %v1582, 8.507059e+37
    %v1584 = vand.u32 %v1542, 2147483648
    %v1585 = vor.u32 1.1754944e-38, %v1584
    %v1586 = vsel %vm1583, %v1585, %v1581
    %v1587 = vmul.f32 1.0, %v1586
    %v1588 = vtanh.pop %v1530
    %v1589 = vmul.f32 %v1572, %v1466
    %v1590 = vmul.f32 %v1557, %v1588
    %v1591 = vadd.f32 %v1589, %v1590
    %v1592 = vtanh.pop %v1591
    %v1593 = vmul.f32 %v1587, %v1592
    %1594 = vst [vmem:[#allocation5 + $0x38] sm:$0xff] %v1593
    %1595 = vst [vmem:[#allocation2] sm:$0xff] %v1593
    %1596 = vst [vmem:[#allocation3] sm:$0xff] %v1591
    %v1597 = vld [vmem:[#allocation5] sm:$0xff]
    %v1598 = vld [vmem:[#allocation5 + $0x8] sm:$0xff]
    %v1599 = vld [vmem:[#allocation5 + $0x10] sm:$0xff]
    %v1600 = vld [vmem:[#allocation5 + $0x18] sm:$0xff]
    %v1601 = vld [vmem:[#allocation5 + $0x20] sm:$0xff]
    %v1602 = vld [vmem:[#allocation5 + $0x28] sm:$0xff]
    %v1603 = vld [vmem:[#allocation5 + $0x30] sm:$0xff]
    %v1604 = vld [vmem:[#allocation5 + $0x38] sm:$0xff]
    %v1605 = vpack.c.bf16 %v1598, %v1597
    %v1606 = vpack.c.bf16 %v1600, %v1599
    %v1607 = vpack.c.bf16 %v1602, %v1601
    %v1608 = vpack.c.bf16 %v1604, %v1603
    %v1609 = vld [vmem:[%s4] sm:$0xf]
    %v1610 = vld [vmem:[%s4 + $0x4] sm:$0xf]
    %v1611 = vld [vmem:[%s4 + $0x8] sm:$0xf]
    %v1612 = vld [vmem:[%s4 + $0xc] sm:$0xf]
    %v1613 = vld [vmem:[%s4 + $0x10] sm:$0xf]
    %v1614 = vld [vmem:[%s4 + $0x14] sm:$0xf]
    %v1615 = vld [vmem:[%s4 + $0x18] sm:$0xf]
    %v1616 = vld [vmem:[%s4 + $0x1c] sm:$0xf]
    %v1617 = vld [vmem:[%s4 + $0x20] sm:$0xf]
    %v1618 = vld [vmem:[%s4 + $0x24] sm:$0xf]
    %v1619 = vld [vmem:[%s4 + $0x28] sm:$0xf]
    %v1620 = vld [vmem:[%s4 + $0x2c] sm:$0xf]
    %v1621 = vld [vmem:[%s4 + $0x30] sm:$0xf]
    %v1622 = vld [vmem:[%s4 + $0x34] sm:$0xf]
    %v1623 = vld [vmem:[%s4 + $0x38] sm:$0xf]
    %v1624 = vld [vmem:[%s4 + $0x3c] sm:$0xf]
    %v1625 = vld [vmem:[%s5] sm:$0x1]
    %v1627 = vperm.slane %v1625, 0
    %v1645 = vunpack.c.l.b16 %v1609
    %v1646 = vunpack.c.l.b16 %v1610
    %v1647 = vunpack.c.l.b16 %v1611
    %v1648 = vunpack.c.l.b16 %v1612
    %v1649 = vunpack.c.l.b16 %v1613
    %v1650 = vunpack.c.l.b16 %v1614
    %v1651 = vunpack.c.l.b16 %v1615
    %v1652 = vunpack.c.l.b16 %v1616
    %v1653 = vunpack.c.l.b16 %v1617
    %v1654 = vunpack.c.l.b16 %v1618
    %v1655 = vunpack.c.l.b16 %v1619
    %v1656 = vunpack.c.l.b16 %v1620
    %v1657 = vunpack.c.l.b16 %v1621
    %v1658 = vunpack.c.l.b16 %v1622
    %v1659 = vunpack.c.l.b16 %v1623
    %v1660 = vunpack.c.l.b16 %v1624
    %v1661 = vpack.c.b16 %v1646, %v1645
    %v1662 = vpack.c.b16 %v1648, %v1647
    %v1663 = vpack.c.b16 %v1650, %v1649
    %v1664 = vpack.c.b16 %v1652, %v1651
    %v1665 = vpack.c.b16 %v1654, %v1653
    %v1666 = vpack.c.b16 %v1656, %v1655
    %v1667 = vpack.c.b16 %v1658, %v1657
    %v1668 = vpack.c.b16 %v1660, %v1659
    %1677 = vmatpush.bf16.msra.mxu0 %v1668
    %1678 = vmatpush.bf16.msra.mxu0 %v1667
    %1679 = vmatpush.bf16.msra.mxu0 %v1666
    %1680 = vmatpush.bf16.msra.mxu0 %v1665
    %1681 = vmatpush.bf16.msra.mxu0 %v1664
    %1682 = vmatpush.bf16.msra.mxu0 %v1663
    %1683 = vmatpush.bf16.msra.mxu0 %v1662
    %1684 = vmatpush.bf16.msra.mxu0 %v1661
    %1685 = vmatmul.bf16.gmra.mxu0 %v1605
    %v1686 = vpop.f32.mrf.mxu0
    %v1687 = vadd.f32 %v1627, %v1686
    %v1688 = vpop.f32.mrf.mxu0
    %v1689 = vadd.f32 %v1627, %v1688
    %1690 = vmatmul.bf16.gmra.mxu0 %v1606
    %v1691 = vpop.f32.mrf.mxu0
    %v1692 = vadd.f32 %v1627, %v1691
    %v1693 = vpop.f32.mrf.mxu0
    %v1694 = vadd.f32 %v1627, %v1693
    %1695 = vmatmul.bf16.gmra.mxu0 %v1607
    %v1696 = vpop.f32.mrf.mxu0
    %v1697 = vadd.f32 %v1627, %v1696
    %v1698 = vpop.f32.mrf.mxu0
    %v1699 = vadd.f32 %v1627, %v1698
    %1700 = vmatmul.bf16.gmra.mxu0 %v1608
    %v1701 = vpop.f32.mrf.mxu0
    %v1702 = vadd.f32 %v1627, %v1701
    %v1703 = vpop.f32.mrf.mxu0
    %v1704 = vadd.f32 %v1627, %v1703
    %1705 = vdwg.mxu0
    %v1706 = vrot.slane %v1692, 4
    %v1707 = vsel %vm66, %v1706, %v1687
    %v1708 = vrot.slane %v1687, 4
    %v1709 = vsel %vm66, %v1692, %v1708
    %v1711 = vunpack.c.l.s4 1983009808
    %v1712 = vunpack.c.0.s8 %v1711
    %v1713 = vperm.slane %v1707, %v1712
    %v1715 = vunpack.c.l.s4 1983009808
    %v1716 = vunpack.c.0.s8 %v1715
    %v1717 = vperm.slane %v1709, %v1716
    %v1718 = vrot.slane %v1694, 4
    %v1719 = vsel %vm66, %v1718, %v1689
    %v1720 = vrot.slane %v1689, 4
    %v1721 = vsel %vm66, %v1694, %v1720
    %v1723 = vunpack.c.l.s4 1983009808
    %v1724 = vunpack.c.0.s8 %v1723
    %v1725 = vperm.slane %v1719, %v1724
    %v1727 = vunpack.c.l.s4 1983009808
    %v1728 = vunpack.c.0.s8 %v1727
    %v1729 = vperm.slane %v1721, %v1728
    %v1730 = vrot.slane %v1702, 4
    %v1731 = vsel %vm66, %v1730, %v1697
    %v1732 = vrot.slane %v1697, 4
    %v1733 = vsel %vm66, %v1702, %v1732
    %v1735 = vunpack.c.l.s4 1983009808
    %v1736 = vunpack.c.0.s8 %v1735
    %v1737 = vperm.slane %v1731, %v1736
    %v1739 = vunpack.c.l.s4 1983009808
    %v1740 = vunpack.c.0.s8 %v1739
    %v1741 = vperm.slane %v1733, %v1740
    %v1742 = vrot.slane %v1704, 4
    %v1743 = vsel %vm66, %v1742, %v1699
    %v1744 = vrot.slane %v1699, 4
    %v1745 = vsel %vm66, %v1704, %v1744
    %v1747 = vunpack.c.l.s4 1983009808
    %v1748 = vunpack.c.0.s8 %v1747
    %v1749 = vperm.slane %v1743, %v1748
    %v1751 = vunpack.c.l.s4 1983009808
    %v1752 = vunpack.c.0.s8 %v1751
    %v1753 = vperm.slane %v1745, %v1752
    %v1754 = vrot.slane %v1725, 4
    %v1755 = vsel %vm66, %v1754, %v1713
    %v1756 = vrot.slane %v1713, 4
    %v1757 = vsel %vm66, %v1725, %v1756
    %v1759 = vunpack.c.l.s4 1934713408
    %v1760 = vunpack.c.0.s8 %v1759
    %v1761 = vperm.slane %v1755, %v1760
    %v1763 = vunpack.c.l.s4 1934713408
    %v1764 = vunpack.c.0.s8 %v1763
    %v1765 = vperm.slane %v1757, %v1764
    %v1766 = vrot.slane %v1729, 4
    %v1767 = vsel %vm66, %v1766, %v1717
    %v1768 = vrot.slane %v1717, 4
    %v1769 = vsel %vm66, %v1729, %v1768
    %v1771 = vunpack.c.l.s4 1934713408
    %v1772 = vunpack.c.0.s8 %v1771
    %v1773 = vperm.slane %v1767, %v1772
    %v1775 = vunpack.c.l.s4 1934713408
    %v1776 = vunpack.c.0.s8 %v1775
    %v1777 = vperm.slane %v1769, %v1776
    %v1778 = vrot.slane %v1749, 4
    %v1779 = vsel %vm66, %v1778, %v1737
    %v1780 = vrot.slane %v1737, 4
    %v1781 = vsel %vm66, %v1749, %v1780
    %v1783 = vunpack.c.l.s4 1934713408
    %v1784 = vunpack.c.0.s8 %v1783
    %v1785 = vperm.slane %v1779, %v1784
    %v1787 = vunpack.c.l.s4 1934713408
    %v1788 = vunpack.c.0.s8 %v1787
    %v1789 = vperm.slane %v1781, %v1788
    %v1790 = vrot.slane %v1753, 4
    %v1791 = vsel %vm66, %v1790, %v1741
    %v1792 = vrot.slane %v1741, 4
    %v1793 = vsel %vm66, %v1753, %v1792
    %v1795 = vunpack.c.l.s4 1934713408
    %v1796 = vunpack.c.0.s8 %v1795
    %v1797 = vperm.slane %v1791, %v1796
    %v1799 = vunpack.c.l.s4 1934713408
    %v1800 = vunpack.c.0.s8 %v1799
    %v1801 = vperm.slane %v1793, %v1800
    %v1802 = vrot.slane %v1785, 4
    %v1803 = vsel %vm66, %v1802, %v1761
    %v1804 = vrot.slane %v1761, 4
    %v1805 = vsel %vm66, %v1785, %v1804
    %v1806 = vrot.slane %v1789, 4
    %v1807 = vsel %vm66, %v1806, %v1765
    %v1808 = vrot.slane %v1765, 4
    %v1809 = vsel %vm66, %v1789, %v1808
    %v1810 = vrot.slane %v1797, 4
    %v1811 = vsel %vm66, %v1810, %v1773
    %v1812 = vrot.slane %v1773, 4
    %v1813 = vsel %vm66, %v1797, %v1812
    %v1814 = vrot.slane %v1801, 4
    %v1815 = vsel %vm66, %v1814, %v1777
    %v1816 = vrot.slane %v1777, 4
    %v1817 = vsel %vm66, %v1801, %v1816
    %1818 = vst [vmem:[%s8] sm:$0xff] %v1803
    %1819 = vst [vmem:[%s8 + $0x8] sm:$0xff] %v1805
    %1820 = vst [vmem:[%s8 + $0x10] sm:$0xff] %v1807
    %1821 = vst [vmem:[%s8 + $0x18] sm:$0xff] %v1809
    %1822 = vst [vmem:[%s8 + $0x20] sm:$0xff] %v1811
    %1823 = vst [vmem:[%s8 + $0x28] sm:$0xff] %v1813
    %1824 = vst [vmem:[%s8 + $0x30] sm:$0xff] %v1815
    %1825 = vst [vmem:[%s8 + $0x38] sm:$0xff] %v1817
    // Predicated region
    $region42: #{generator_forward.1} parent=1 // pred_check
      %p1826 = pneg %p49
    $region43: #{generator_forward.1} parent=1 // pred_check_branch
      %1828 = sbr.rel (%p1826) target = $region45
    $region44: #{generator_forward.1} parent=1 // pred_region
      %1829 = vst [vmem:[%s9] sm:$0xff] %v1593
      %1830 = vst [vmem:[%s10] sm:$0xff] %v1591
    $region45: #{generator_forward.1} parent=1 // pred_fallthru
      _
    // Predicated region
    $region46: #{generator_forward.1} parent=1 // pred_check
      _
    $region47: #{generator_forward.1} parent=1 // pred_check_branch
      %1832 = sbr.rel (0) target = $region49
    $region48: #{generator_forward.1} parent=1 // pred_region
      _
    $region49: #{generator_forward.1} parent=1 // pred_fallthru
      _
    // Predicated region
    $region50: #{generator_forward.1} parent=1 // pred_check
      _
    $region51: #{generator_forward.1} parent=1 // pred_check_branch
      %1834 = sbr.rel (0) target = $region53
    $region52: #{generator_forward.1} parent=1 // pred_region
      _
    $region53: #{generator_forward.1} parent=1 // pred_fallthru
      _
    // Predicated region
    $region54: #{generator_forward.1} parent=1 // pred_check
      _
    $region55: #{generator_forward.1} parent=1 // pred_check_branch
      %1836 = sbr.rel (0) target = $region57
    $region56: #{generator_forward.1} parent=1 // pred_region
      _
    $region57: #{generator_forward.1} parent=1 // pred_fallthru
      _
    // Predicated region
    $region58: #{generator_forward.1} parent=1 // pred_check
      _
    $region59: #{generator_forward.1} parent=1 // pred_check_branch
      %1838 = sbr.rel (0) target = $region61
    $region60: #{generator_forward.1} parent=1 // pred_region
      _
    $region61: #{generator_forward.1} parent=1 // pred_fallthru
      _
    // Predicated region
    $region62: #{generator_forward.1} parent=1 // pred_check
      _
    $region63: #{generator_forward.1} parent=1 // pred_check_branch
      %1840 = sbr.rel (0) target = $region65
    $region64: #{generator_forward.1} parent=1 // pred_region
      _
    $region65: #{generator_forward.1} parent=1 // pred_fallthru
      _
    // Predicated region
    $region66: #{generator_forward.1} parent=1 // pred_check
      _
    $region67: #{generator_forward.1} parent=1 // pred_check_branch
      %1842 = sbr.rel (0) target = $region69
    $region68: #{generator_forward.1} parent=1 // pred_region
      _
    $region69: #{generator_forward.1} parent=1 // pred_fallthru
      _
    %1843 = vsyncpa [#allocation7], 1

</llo_original>
